<compile_context>
chip_gen: v7x
topology: tpu7x:2x2x1
jax: 0.10.0
libtpu: 0.0.40
codegen_flags: <defaults>
</compile_context>

<pallas_src>
import jax
import jax.numpy as jnp
from jax.experimental import pallas as pl
from jax.experimental.pallas import tpu as pltpu


def _round_up(v, m):
    return (v + m - 1) // m * m


def _default_vmem_limit_bytes():
    """Per-generation VMEM budget: ~3/4 of physical VMEM, capped at 100 MiB.

    v5e/v6e (128 MiB physical) -> ~96-100 MiB, v7x (64 MiB per TC) -> 48 MiB.
    Falls back to 48 MiB if the TPU info query is unavailable (e.g. interpret).
    """
    try:
        cap = int(pltpu.get_tpu_info().vmem_capacity_bytes)
        return max(32 * 1024 * 1024, min((cap * 3) // 4, 100 * 1024 * 1024))
    except Exception:
        return 48 * 1024 * 1024


def _make_kernel(cutoffs_ext, shortlist_size, head_size, head_pad,
                 hsz_pads, osz_pads, n_clusters):
    """Builds the per-batch-tile kernel. All sizes are trace-time Python ints."""
    NEG = -1e30   # Python float (NOT a jnp array: avoids captured-constant
                  # pallas error). Finite "-inf" avoids 0*inf NaNs downstream.

    def kernel(x_ref, tgt_ref, wcat_ref, *rest):
        w2_refs = rest[:n_clusters]
        out_ref = rest[n_clusters]

        t = tgt_ref[...]                        # (1, TN) int32 targets
        tn = t.shape[1]

        # One wide MXU matmul [head ; w1_0 ; w1_1 ; ...] contracted over D.
        # Contracting x's D axis directly (instead of transposing x in the
        # wrapper) keeps batch on the lane axis of the result with no HBM
        # relayout of x.
        cat = jax.lax.dot_general(
            wcat_ref[...], x_ref[...],
            dimension_numbers=(((1,), (1,)), ((), ())),
            preferred_element_type=jnp.float32)        # (C_pad, TN) f32

        # ---------------- head: masked logsumexp ----------------
        head_logits = cat[0:head_pad, :]                # (head_pad, TN)
        hrows = jax.lax.broadcasted_iota(jnp.int32, (head_pad, tn), 0)
        if head_pad > head_size:
            head_logits = jnp.where(hrows < head_size, head_logits, NEG)
        hmax = jnp.max(head_logits, axis=0, keepdims=True)        # (1, TN)
        hlse = hmax + jnp.log(
            jnp.sum(jnp.exp(head_logits - hmax), axis=0, keepdims=True))

        # ---- cluster routing: pure function of t, hoisted out of the loop ----
        gather_idx = t                                  # shortlist rows keep own id
        for c in range(n_clusters):
            low, high = cutoffs_ext[c], cutoffs_ext[c + 1]
            gather_idx = jnp.where((t >= low) & (t < high),
                                   shortlist_size + c, gather_idx)

        # ---- fused head gather, consumed immediately so head_logits/hlse die
        #      before the heavy per-cluster work (shorter live ranges). --------
        head_zt = jnp.sum(jnp.where(hrows == gather_idx, head_logits, 0.0),
                          axis=0, keepdims=True)
        output = head_zt - hlse                         # (1, TN) f32 accumulator

        # ---------------- tail clusters (unrolled at trace time) -------------
        offset = head_pad
        for c in range(n_clusters):
            low, high = cutoffs_ext[c], cutoffs_ext[c + 1]
            osz = high - low
            hsz_p = hsz_pads[c]
            osz_p = osz_pads[c]

            in_cluster = (t >= low) & (t < high)        # (1, TN) bool

            h = cat[offset:offset + hsz_p, :]           # (hsz_p, TN) f32 view
            offset += hsz_p

            w2 = w2_refs[c][...]                        # (osz_p, hsz_p)
            logits = jnp.dot(w2, h.astype(w2.dtype),
                             preferred_element_type=jnp.float32)   # (osz_p, TN)
            rows = jax.lax.broadcasted_iota(jnp.int32, (osz_p, tn), 0)
            if osz_p > osz:
                logits = jnp.where(rows < osz, logits, NEG)

            m = jnp.max(logits, axis=0, keepdims=True)              # (1, TN)
            lse = m + jnp.log(
                jnp.sum(jnp.exp(logits - m), axis=0, keepdims=True))

            rel = jnp.clip(t - low, 0, osz - 1)                     # (1, TN)
            z_t = jnp.sum(jnp.where(rows == rel, logits, 0.0),
                          axis=0, keepdims=True)                    # gather
            output = output + jnp.where(in_cluster, z_t - lse, 0.0)

        out_ref[...] = output                           # lane-dense (1, TN)

    return kernel


def adaptive_log_softmax_with_loss(x, target, head_w, tail_ws, cutoffs_ext,
                                   shortlist_size, *, tile_n=256,
                                   param_dtype=jnp.float32,
                                   vmem_limit_bytes=None):
    """Returns (output[N], loss[]) matching AdaptiveLogSoftmaxWithLoss.forward.

    head_w:  (head_size, in_features)  torch Linear weight (no bias)
    tail_ws: list of (w1 (hsz, in_features), w2 (osz, hsz)) torch weights
    param_dtype: jnp.bfloat16 halves weight DMA and is full-rate on the MXU on
        ALL generations (v5e/v6e/v7x); activations x stay f32 regardless and
        all post-matmul math is f32.
    tile_n: batch tile on the lane axis. 256 fills the 256-wide MXU on
        v6e/v7x; sweep 128/256/512 (keep >=2 grid tiles on v7x megacore).
    """
    assert tile_n % 128 == 0, "tile_n must be a multiple of 128 (lane width)"
    n, d = x.shape
    n_clusters = len(tail_ws)
    head_size = int(head_w.shape[0])
    cutoffs_ext = [int(c) for c in cutoffs_ext]      # keep trace-time Python ints
    shortlist_size = int(shortlist_size)

    # Sublane granule for weight-slab rows / logit rows (8 for f32, 16 for bf16).
    sub = 8 if jnp.dtype(param_dtype).itemsize >= 4 else 16
    d_pad = _round_up(d, 128)                        # MXU contraction dim
    head_pad = _round_up(head_size, sub)

    def _pad2(w, r, c):
        return jnp.pad(w, ((0, r - w.shape[0]), (0, c - w.shape[1])))

    # ---- weight prep: pad and concat head + all w1 into one slab ----
    rows = [_pad2(head_w, head_pad, d_pad)]
    hsz_pads, osz_pads, w2_list = [], [], []
    for (w1, w2) in tail_ws:
        hsz, osz = int(w1.shape[0]), int(w2.shape[0])
        hsz_p = _round_up(hsz, 128)                  # lane dim of w2 / MXU K
        osz_p = _round_up(osz, sub)                  # sublane-only: granule pad
        hsz_pads.append(hsz_p)
        osz_pads.append(osz_p)
        rows.append(_pad2(w1, hsz_p, d_pad))
        w2_list.append(_pad2(w2, osz_p, hsz_p).astype(param_dtype))
    w_cat = jnp.concatenate(rows, axis=0).astype(param_dtype)   # (C_pad, d_pad)

    # ---- activation prep: pad batch and D; x stays f32 (no transpose) ----
    n_pad = _round_up(n, tile_n)
    x_p = jnp.pad(x.astype(jnp.float32), ((0, n_pad - n), (0, d_pad - d)))
    tgt = jnp.pad(target.astype(jnp.int32), (0, n_pad - n)).reshape(1, n_pad)

    if vmem_limit_bytes is None:
        vmem_limit_bytes = _default_vmem_limit_bytes()

    kernel = _make_kernel(cutoffs_ext, shortlist_size, head_size, head_pad,
                          hsz_pads, osz_pads, n_clusters)

    grid = (n_pad // tile_n,)
    out_specs = pl.BlockSpec((1, tile_n), lambda i: (0, i))
    out_shape = jax.ShapeDtypeStruct((1, n_pad), jnp.float32)
    compiler_params = pltpu.CompilerParams(
        dimension_semantics=("parallel",),
        vmem_limit_bytes=vmem_limit_bytes)

    def _run(single_buffer_weights):
        if single_buffer_weights:
            # Grid-invariant weights: single-buffer. Double-buffering a block
            # whose index never changes buys zero overlap but doubles the VMEM
            # held for weights (dominant consumer at production sizes).
            def wspec(s):
                return pl.BlockSpec(s, lambda i: (0, 0),
                                    pipeline_mode=pl.Buffered(1))
        else:
            def wspec(s):
                return pl.BlockSpec(s, lambda i: (0, 0))
        in_specs = ([pl.BlockSpec((tile_n, d_pad), lambda i: (i, 0)),   # x tile
                     pl.BlockSpec((1, tile_n), lambda i: (0, i)),       # targets
                     wspec(w_cat.shape)]                                # fused W
                    + [wspec(w.shape) for w in w2_list])                # tail w2
        return pl.pallas_call(
            kernel,
            grid=grid,
            in_specs=in_specs,
            out_specs=out_specs,
            out_shape=out_shape,
            compiler_params=compiler_params,
        )(x_p, tgt, w_cat, *w2_list)

    try:
        out_row = _run(True)
    except Exception:
        # Fallback for jax builds without BlockSpec pipeline_mode support.
        out_row = _run(False)

    out = out_row[0, :n]               # drop batch padding
    loss = jnp.mean(-out)              # loss mean in the wrapper (fused XLA reduce)
    return out, loss


def reference(x, target, head_w, tail_ws, cutoffs_ext, shortlist_size):
    """Pure-JAX reference with identical semantics (for verification)."""
    head_lp = jax.nn.log_softmax(x @ head_w.T, axis=1)
    n = x.shape[0]
    gather = target
    out = jnp.zeros(n, jnp.float32)
    for c, (w1, w2) in enumerate(tail_ws):
        low, high = cutoffs_ext[c], cutoffs_ext[c + 1]
        mask = (target >= low) & (target < high)
        gather = jnp.where(mask, shortlist_size + c, gather)
        lp = jax.nn.log_softmax((x @ w1.T) @ w2.T, axis=1)
        rel = jnp.clip(target - low, 0, lp.shape[1] - 1)
        local = jnp.take_along_axis(lp, rel[:, None], axis=1)[:, 0]
        out = out + jnp.where(mask, local, 0.0)
    out = out + jnp.take_along_axis(head_lp, gather[:, None], axis=1)[:, 0]
    return out, jnp.mean(-out)


if __name__ == "__main__":
    # Module config (small, consistent with the constructor).
    in_features = 32
    n_classes = 20
    cutoffs = [8, 14]
    div_value = 4.0
    batch = 300            # not a multiple of tile_n -> exercises padding + 2 tiles

    cutoffs_ext = cutoffs + [n_classes]                  # [8, 14, 20]
    shortlist_size = cutoffs_ext[0]                      # 8
    n_clusters = len(cutoffs_ext) - 1                    # 2
    head_size = shortlist_size + n_clusters              # 10

    key = jax.random.PRNGKey(0)
    keys = jax.random.split(key, 4 + 2 * n_clusters)

    # Deterministic parameter init (head_bias=False, tail biases=False).
    head_w = 0.1 * jax.random.normal(keys[0], (head_size, in_features), jnp.float32)
    tail_ws = []
    for i in range(n_clusters):
        hsz = int(in_features // div_value ** i)
        osz = cutoffs_ext[i + 1] - cutoffs_ext[i]
        w1 = 0.1 * jax.random.normal(keys[1 + 2 * i], (hsz, in_features), jnp.float32)
        w2 = 0.1 * jax.random.normal(keys[2 + 2 * i], (osz, hsz), jnp.float32)
        tail_ws.append((w1, w2))

    # Inputs.
    x = jax.random.normal(keys[-2], (batch, in_features), jnp.float32)
    target = jax.random.randint(keys[-1], (batch,), 0, n_classes, jnp.int32)

    out, loss = adaptive_log_softmax_with_loss(
        x, target, head_w, tail_ws, cutoffs_ext, shortlist_size)
    jax.block_until_ready((out, loss))

    ref_out, ref_loss = reference(x, target, head_w, tail_ws, cutoffs_ext,
                                  shortlist_size)
    assert out.shape == (batch,)
    # Tolerance covers TPU default-precision matmul (bf16 passes) accumulation
    # order differences between the kernel and the XLA reference.
    assert jnp.allclose(out, ref_out, rtol=2e-3, atol=2e-3), (out[:8], ref_out[:8])
    assert jnp.allclose(loss, ref_loss, rtol=2e-3, atol=2e-3), (loss, ref_loss)

    print("KERNEL_OK")
</pallas_src>

<mosaic_0001>
module attributes {stable_mosaic.version = 11 : i64} {
  func.func @kernel(%arg0: i32, %arg1: memref<256x128xf32, #tpu.memory_space<vmem>>, %arg2: memref<1x256xi32, #tpu.memory_space<vmem>>, %arg3: memref<272x128xf32, #tpu.memory_space<vmem>>, %arg4: memref<8x128xf32, #tpu.memory_space<vmem>>, %arg5: memref<8x128xf32, #tpu.memory_space<vmem>>, %arg6: memref<1x256xf32, #tpu.memory_space<vmem>>) attributes {dimension_semantics = [#tpu.dimension_semantics<parallel>], iteration_bounds = array<i64: 2>, scalar_prefetch = 0 : i64, scratch_operands = 0 : i64, tpu.core_type = #tpu.core_type<tc>, window_params = [{transform_indices = @transform_0, window_bounds = array<i64: 256, 128>}, {transform_indices = @transform_1, window_bounds = array<i64: 1, 256>}, {pipeline_mode = #tpu.pipeline_mode<synchronous>, transform_indices = @transform_2, window_bounds = array<i64: 272, 128>}, {pipeline_mode = #tpu.pipeline_mode<synchronous>, transform_indices = @transform_3, window_bounds = array<i64: 8, 128>}, {pipeline_mode = #tpu.pipeline_mode<synchronous>, transform_indices = @transform_4, window_bounds = array<i64: 8, 128>}, {transform_indices = @transform_5, window_bounds = array<i64: 1, 256>}]} {
    %c0 = arith.constant 0 : index
    %c0_0 = arith.constant 0 : index
    %0 = vector.load %arg2[%c0, %c0_0] : memref<1x256xi32, #tpu.memory_space<vmem>>, vector<1x256xi32>
    %c0_1 = arith.constant 0 : index
    %c0_2 = arith.constant 0 : index
    %1 = vector.load %arg3[%c0_1, %c0_2] : memref<272x128xf32, #tpu.memory_space<vmem>>, vector<272x128xf32>
    %c0_3 = arith.constant 0 : index
    %c0_4 = arith.constant 0 : index
    %2 = vector.load %arg1[%c0_3, %c0_4] : memref<256x128xf32, #tpu.memory_space<vmem>>, vector<256x128xf32>
    %cst = arith.constant dense<0.000000e+00> : vector<272x256xf32>
    %3 = tpu.matmul %1, %2, %cst {dimension_numbers = #tpu.dot_dimension_numbers<[1], [1], [0], [0], [0, 0, 1, 0], [], []>} : vector<272x128xf32>, vector<256x128xf32>, vector<272x256xf32> -> vector<272x256xf32>
    %4 = vector.extract_strided_slice %3 {offsets = [0, 0], sizes = [16, 256], strides = [1, 1]} : vector<272x256xf32> to vector<16x256xf32>
    %5 = tpu.iota {dimensions = array<i32: 0>} : vector<16x256xi32>
    %c10_i32 = arith.constant 10 : i32
    %6 = vector.broadcast %c10_i32 : i32 to vector<16x256xi32>
    %7 = arith.cmpi slt, %5, %6 : vector<16x256xi32>
    %cst_5 = arith.constant -1.000000e+30 : f32
    %8 = vector.broadcast %cst_5 : f32 to vector<16x256xf32>
    %9 = arith.select %7, %4, %8 : vector<16x256xi1>, vector<16x256xf32>
    %cst_6 = arith.constant dense<0xFF800000> : vector<256xf32>
    %10 = vector.multi_reduction <maximumf>, %9, %cst_6 [0] : vector<16x256xf32> to vector<256xf32>
    %11 = vector.shape_cast %10 : vector<256xf32> to vector<1x256xf32>
    %12 = vector.broadcast %11 : vector<1x256xf32> to vector<16x256xf32>
    %13 = arith.subf %9, %12 : vector<16x256xf32>
    %14 = math.exp %13 : vector<16x256xf32>
    %cst_7 = arith.constant dense<0.000000e+00> : vector<256xf32>
    %15 = vector.multi_reduction <add>, %14, %cst_7 [0] : vector<16x256xf32> to vector<256xf32>
    %16 = vector.shape_cast %15 : vector<256xf32> to vector<1x256xf32>
    %17 = math.log %16 : vector<1x256xf32>
    %18 = arith.addf %11, %17 : vector<1x256xf32>
    %c8_i32 = arith.constant 8 : i32
    %19 = vector.broadcast %c8_i32 : i32 to vector<1x256xi32>
    %20 = arith.cmpi sge, %0, %19 : vector<1x256xi32>
    %c14_i32 = arith.constant 14 : i32
    %21 = vector.broadcast %c14_i32 : i32 to vector<1x256xi32>
    %22 = arith.cmpi slt, %0, %21 : vector<1x256xi32>
    %23 = arith.andi %20, %22 : vector<1x256xi1>
    %c8_i32_8 = arith.constant 8 : i32
    %24 = vector.broadcast %c8_i32_8 : i32 to vector<1x256xi32>
    %25 = arith.select %23, %24, %0 : vector<1x256xi1>, vector<1x256xi32>
    %c14_i32_9 = arith.constant 14 : i32
    %26 = vector.broadcast %c14_i32_9 : i32 to vector<1x256xi32>
    %27 = arith.cmpi sge, %0, %26 : vector<1x256xi32>
    %c20_i32 = arith.constant 20 : i32
    %28 = vector.broadcast %c20_i32 : i32 to vector<1x256xi32>
    %29 = arith.cmpi slt, %0, %28 : vector<1x256xi32>
    %30 = arith.andi %27, %29 : vector<1x256xi1>
    %c9_i32 = arith.constant 9 : i32
    %31 = vector.broadcast %c9_i32 : i32 to vector<1x256xi32>
    %32 = arith.select %30, %31, %25 : vector<1x256xi1>, vector<1x256xi32>
    %33 = vector.broadcast %32 : vector<1x256xi32> to vector<16x256xi32>
    %34 = arith.cmpi eq, %5, %33 : vector<16x256xi32>
    %cst_10 = arith.constant 0.000000e+00 : f32
    %35 = vector.broadcast %cst_10 : f32 to vector<16x256xf32>
    %36 = arith.select %34, %9, %35 : vector<16x256xi1>, vector<16x256xf32>
    %cst_11 = arith.constant dense<0.000000e+00> : vector<256xf32>
    %37 = vector.multi_reduction <add>, %36, %cst_11 [0] : vector<16x256xf32> to vector<256xf32>
    %38 = vector.shape_cast %37 : vector<256xf32> to vector<1x256xf32>
    %39 = arith.subf %38, %18 : vector<1x256xf32>
    %c8_i32_12 = arith.constant 8 : i32
    %40 = vector.broadcast %c8_i32_12 : i32 to vector<1x256xi32>
    %41 = arith.cmpi sge, %0, %40 : vector<1x256xi32>
    %c14_i32_13 = arith.constant 14 : i32
    %42 = vector.broadcast %c14_i32_13 : i32 to vector<1x256xi32>
    %43 = arith.cmpi slt, %0, %42 : vector<1x256xi32>
    %44 = arith.andi %41, %43 : vector<1x256xi1>
    %45 = vector.extract_strided_slice %3 {offsets = [16, 0], sizes = [128, 256], strides = [1, 1]} : vector<272x256xf32> to vector<128x256xf32>
    %c0_14 = arith.constant 0 : index
    %c0_15 = arith.constant 0 : index
    %46 = vector.load %arg4[%c0_14, %c0_15] : memref<8x128xf32, #tpu.memory_space<vmem>>, vector<8x128xf32>
    %cst_16 = arith.constant dense<0.000000e+00> : vector<8x256xf32>
    %47 = tpu.matmul %46, %45, %cst_16 {dimension_numbers = #tpu.dot_dimension_numbers<[1], [0], [0], [1], [0, 0, 1, 1], [], []>} : vector<8x128xf32>, vector<128x256xf32>, vector<8x256xf32> -> vector<8x256xf32>
    %48 = tpu.iota {dimensions = array<i32: 0>} : vector<8x256xi32>
    %c6_i32 = arith.constant 6 : i32
    %49 = vector.broadcast %c6_i32 : i32 to vector<8x256xi32>
    %50 = arith.cmpi slt, %48, %49 : vector<8x256xi32>
    %cst_17 = arith.constant -1.000000e+30 : f32
    %51 = vector.broadcast %cst_17 : f32 to vector<8x256xf32>
    %52 = arith.select %50, %47, %51 : vector<8x256xi1>, vector<8x256xf32>
    %cst_18 = arith.constant dense<0xFF800000> : vector<256xf32>
    %53 = vector.multi_reduction <maximumf>, %52, %cst_18 [0] : vector<8x256xf32> to vector<256xf32>
    %54 = vector.shape_cast %53 : vector<256xf32> to vector<1x256xf32>
    %55 = vector.broadcast %54 : vector<1x256xf32> to vector<8x256xf32>
    %56 = arith.subf %52, %55 : vector<8x256xf32>
    %57 = math.exp %56 : vector<8x256xf32>
    %cst_19 = arith.constant dense<0.000000e+00> : vector<256xf32>
    %58 = vector.multi_reduction <add>, %57, %cst_19 [0] : vector<8x256xf32> to vector<256xf32>
    %59 = vector.shape_cast %58 : vector<256xf32> to vector<1x256xf32>
    %60 = math.log %59 : vector<1x256xf32>
    %61 = arith.addf %54, %60 : vector<1x256xf32>
    %c8_i32_20 = arith.constant 8 : i32
    %62 = vector.broadcast %c8_i32_20 : i32 to vector<1x256xi32>
    %63 = arith.subi %0, %62 : vector<1x256xi32>
    %c0_i32 = arith.constant 0 : i32
    %c5_i32 = arith.constant 5 : i32
    %64 = vector.broadcast %c0_i32 : i32 to vector<1x256xi32>
    %65 = arith.maxsi %64, %63 : vector<1x256xi32>
    %66 = vector.broadcast %c5_i32 : i32 to vector<1x256xi32>
    %67 = arith.minsi %66, %65 : vector<1x256xi32>
    %68 = vector.broadcast %67 : vector<1x256xi32> to vector<8x256xi32>
    %69 = arith.cmpi eq, %48, %68 : vector<8x256xi32>
    %cst_21 = arith.constant 0.000000e+00 : f32
    %70 = vector.broadcast %cst_21 : f32 to vector<8x256xf32>
    %71 = arith.select %69, %52, %70 : vector<8x256xi1>, vector<8x256xf32>
    %cst_22 = arith.constant dense<0.000000e+00> : vector<256xf32>
    %72 = vector.multi_reduction <add>, %71, %cst_22 [0] : vector<8x256xf32> to vector<256xf32>
    %73 = vector.shape_cast %72 : vector<256xf32> to vector<1x256xf32>
    %74 = arith.subf %73, %61 : vector<1x256xf32>
    %cst_23 = arith.constant 0.000000e+00 : f32
    %75 = vector.broadcast %cst_23 : f32 to vector<1x256xf32>
    %76 = arith.select %44, %74, %75 : vector<1x256xi1>, vector<1x256xf32>
    %77 = arith.addf %39, %76 : vector<1x256xf32>
    %c14_i32_24 = arith.constant 14 : i32
    %78 = vector.broadcast %c14_i32_24 : i32 to vector<1x256xi32>
    %79 = arith.cmpi sge, %0, %78 : vector<1x256xi32>
    %c20_i32_25 = arith.constant 20 : i32
    %80 = vector.broadcast %c20_i32_25 : i32 to vector<1x256xi32>
    %81 = arith.cmpi slt, %0, %80 : vector<1x256xi32>
    %82 = arith.andi %79, %81 : vector<1x256xi1>
    %83 = vector.extract_strided_slice %3 {offsets = [144, 0], sizes = [128, 256], strides = [1, 1]} : vector<272x256xf32> to vector<128x256xf32>
    %c0_26 = arith.constant 0 : index
    %c0_27 = arith.constant 0 : index
    %84 = vector.load %arg5[%c0_26, %c0_27] : memref<8x128xf32, #tpu.memory_space<vmem>>, vector<8x128xf32>
    %cst_28 = arith.constant dense<0.000000e+00> : vector<8x256xf32>
    %85 = tpu.matmul %84, %83, %cst_28 {dimension_numbers = #tpu.dot_dimension_numbers<[1], [0], [0], [1], [0, 0, 1, 1], [], []>} : vector<8x128xf32>, vector<128x256xf32>, vector<8x256xf32> -> vector<8x256xf32>
    %86 = tpu.iota {dimensions = array<i32: 0>} : vector<8x256xi32>
    %c6_i32_29 = arith.constant 6 : i32
    %87 = vector.broadcast %c6_i32_29 : i32 to vector<8x256xi32>
    %88 = arith.cmpi slt, %86, %87 : vector<8x256xi32>
    %cst_30 = arith.constant -1.000000e+30 : f32
    %89 = vector.broadcast %cst_30 : f32 to vector<8x256xf32>
    %90 = arith.select %88, %85, %89 : vector<8x256xi1>, vector<8x256xf32>
    %cst_31 = arith.constant dense<0xFF800000> : vector<256xf32>
    %91 = vector.multi_reduction <maximumf>, %90, %cst_31 [0] : vector<8x256xf32> to vector<256xf32>
    %92 = vector.shape_cast %91 : vector<256xf32> to vector<1x256xf32>
    %93 = vector.broadcast %92 : vector<1x256xf32> to vector<8x256xf32>
    %94 = arith.subf %90, %93 : vector<8x256xf32>
    %95 = math.exp %94 : vector<8x256xf32>
    %cst_32 = arith.constant dense<0.000000e+00> : vector<256xf32>
    %96 = vector.multi_reduction <add>, %95, %cst_32 [0] : vector<8x256xf32> to vector<256xf32>
    %97 = vector.shape_cast %96 : vector<256xf32> to vector<1x256xf32>
    %98 = math.log %97 : vector<1x256xf32>
    %99 = arith.addf %92, %98 : vector<1x256xf32>
    %c14_i32_33 = arith.constant 14 : i32
    %100 = vector.broadcast %c14_i32_33 : i32 to vector<1x256xi32>
    %101 = arith.subi %0, %100 : vector<1x256xi32>
    %c0_i32_34 = arith.constant 0 : i32
    %c5_i32_35 = arith.constant 5 : i32
    %102 = vector.broadcast %c0_i32_34 : i32 to vector<1x256xi32>
    %103 = arith.maxsi %102, %101 : vector<1x256xi32>
    %104 = vector.broadcast %c5_i32_35 : i32 to vector<1x256xi32>
    %105 = arith.minsi %104, %103 : vector<1x256xi32>
    %106 = vector.broadcast %105 : vector<1x256xi32> to vector<8x256xi32>
    %107 = arith.cmpi eq, %86, %106 : vector<8x256xi32>
    %cst_36 = arith.constant 0.000000e+00 : f32
    %108 = vector.broadcast %cst_36 : f32 to vector<8x256xf32>
    %109 = arith.select %107, %90, %108 : vector<8x256xi1>, vector<8x256xf32>
    %cst_37 = arith.constant dense<0.000000e+00> : vector<256xf32>
    %110 = vector.multi_reduction <add>, %109, %cst_37 [0] : vector<8x256xf32> to vector<256xf32>
    %111 = vector.shape_cast %110 : vector<256xf32> to vector<1x256xf32>
    %112 = arith.subf %111, %99 : vector<1x256xf32>
    %cst_38 = arith.constant 0.000000e+00 : f32
    %113 = vector.broadcast %cst_38 : f32 to vector<1x256xf32>
    %114 = arith.select %82, %112, %113 : vector<1x256xi1>, vector<1x256xf32>
    %115 = arith.addf %77, %114 : vector<1x256xf32>
    %c0_39 = arith.constant 0 : index
    %c0_40 = arith.constant 0 : index
    %116 = vector.load %arg6[%c0_39, %c0_40] : memref<1x256xf32, #tpu.memory_space<vmem>>, vector<1x256xf32>
    tpu.vector_store %arg6[%c0_39, %c0_40], %115 {strides = array<i32>} : memref<1x256xf32, #tpu.memory_space<vmem>>, vector<1x256xf32>,
    return
  }
  func.func @transform_0(%arg0: i32) -> (i32, i32) {
    %c0_i32 = arith.constant 0 : i32
    %c0_i32_0 = arith.constant 0 : i32
    return %arg0, %c0_i32 : i32, i32
  }
  func.func @transform_1(%arg0: i32) -> (i32, i32) {
    %c0_i32 = arith.constant 0 : i32
    %c0_i32_0 = arith.constant 0 : i32
    return %c0_i32, %arg0 : i32, i32
  }
  func.func @transform_2(%arg0: i32) -> (i32, i32) {
    %c0_i32 = arith.constant 0 : i32
    %c0_i32_0 = arith.constant 0 : i32
    %c0_i32_1 = arith.constant 0 : i32
    return %c0_i32, %c0_i32_0 : i32, i32
  }
  func.func @transform_3(%arg0: i32) -> (i32, i32) {
    %c0_i32 = arith.constant 0 : i32
    %c0_i32_0 = arith.constant 0 : i32
    %c0_i32_1 = arith.constant 0 : i32
    return %c0_i32, %c0_i32_0 : i32, i32
  }
  func.func @transform_4(%arg0: i32) -> (i32, i32) {
    %c0_i32 = arith.constant 0 : i32
    %c0_i32_0 = arith.constant 0 : i32
    %c0_i32_1 = arith.constant 0 : i32
    return %c0_i32, %c0_i32_0 : i32, i32
  }
  func.func @transform_5(%arg0: i32) -> (i32, i32) {
    %c0_i32 = arith.constant 0 : i32
    %c0_i32_0 = arith.constant 0 : i32
    return %c0_i32, %arg0 : i32, i32
  }
}

module attributes {stable_mosaic.version = 11 : i64} {
  func.func @kernel(%arg0: i32, %arg1: memref<256x128xf32, #tpu.memory_space<vmem>>, %arg2: memref<1x256xi32, #tpu.memory_space<vmem>>, %arg3: memref<272x128xf32, #tpu.memory_space<vmem>>, %arg4: memref<8x128xf32, #tpu.memory_space<vmem>>, %arg5: memref<8x128xf32, #tpu.memory_space<vmem>>, %arg6: memref<1x256xf32, #tpu.memory_space<vmem>>) attributes {dimension_semantics = [#tpu.dimension_semantics<parallel>], iteration_bounds = array<i64: 2>, scalar_prefetch = 0 : i64, scratch_operands = 0 : i64, tpu.core_type = #tpu.core_type<tc>, window_params = [{transform_indices = @transform_0, window_bounds = array<i64: 256, 128>}, {transform_indices = @transform_1, window_bounds = array<i64: 1, 256>}, {pipeline_mode = #tpu.pipeline_mode<synchronous>, transform_indices = @transform_2, window_bounds = array<i64: 272, 128>}, {pipeline_mode = #tpu.pipeline_mode<synchronous>, transform_indices = @transform_3, window_bounds = array<i64: 8, 128>}, {pipeline_mode = #tpu.pipeline_mode<synchronous>, transform_indices = @transform_4, window_bounds = array<i64: 8, 128>}, {transform_indices = @transform_5, window_bounds = array<i64: 1, 256>}]} {
    %c0 = arith.constant 0 : index
    %c0_0 = arith.constant 0 : index
    %0 = vector.load %arg2[%c0, %c0_0] : memref<1x256xi32, #tpu.memory_space<vmem>>, vector<1x256xi32>
    %c0_1 = arith.constant 0 : index
    %c0_2 = arith.constant 0 : index
    %1 = vector.load %arg3[%c0_1, %c0_2] : memref<272x128xf32, #tpu.memory_space<vmem>>, vector<272x128xf32>
    %c0_3 = arith.constant 0 : index
    %c0_4 = arith.constant 0 : index
    %2 = vector.load %arg1[%c0_3, %c0_4] : memref<256x128xf32, #tpu.memory_space<vmem>>, vector<256x128xf32>
    %cst = arith.constant dense<0.000000e+00> : vector<272x256xf32>
    %3 = tpu.matmul %1, %2, %cst {dimension_numbers = #tpu.dot_dimension_numbers<[1], [1], [0], [0], [0, 0, 1, 0], [], []>} : vector<272x128xf32>, vector<256x128xf32>, vector<272x256xf32> -> vector<272x256xf32>
    %4 = vector.extract_strided_slice %3 {offsets = [0, 0], sizes = [16, 256], strides = [1, 1]} : vector<272x256xf32> to vector<16x256xf32>
    %5 = tpu.iota {dimensions = array<i32: 0>} : vector<16x256xi32>
    %c10_i32 = arith.constant 10 : i32
    %6 = vector.broadcast %c10_i32 : i32 to vector<16x256xi32>
    %7 = arith.cmpi slt, %5, %6 : vector<16x256xi32>
    %cst_5 = arith.constant -1.000000e+30 : f32
    %8 = vector.broadcast %cst_5 : f32 to vector<16x256xf32>
    %9 = arith.select %7, %4, %8 : vector<16x256xi1>, vector<16x256xf32>
    %cst_6 = arith.constant dense<0xFF800000> : vector<256xf32>
    %10 = vector.multi_reduction <maximumf>, %9, %cst_6 [0] : vector<16x256xf32> to vector<256xf32>
    %11 = vector.shape_cast %10 : vector<256xf32> to vector<1x256xf32>
    %12 = vector.broadcast %11 : vector<1x256xf32> to vector<16x256xf32>
    %13 = arith.subf %9, %12 : vector<16x256xf32>
    %14 = math.exp %13 : vector<16x256xf32>
    %cst_7 = arith.constant dense<0.000000e+00> : vector<256xf32>
    %15 = vector.multi_reduction <add>, %14, %cst_7 [0] : vector<16x256xf32> to vector<256xf32>
    %16 = vector.shape_cast %15 : vector<256xf32> to vector<1x256xf32>
    %17 = math.log %16 : vector<1x256xf32>
    %18 = arith.addf %11, %17 : vector<1x256xf32>
    %c8_i32 = arith.constant 8 : i32
    %19 = vector.broadcast %c8_i32 : i32 to vector<1x256xi32>
    %20 = arith.cmpi sge, %0, %19 : vector<1x256xi32>
    %c14_i32 = arith.constant 14 : i32
    %21 = vector.broadcast %c14_i32 : i32 to vector<1x256xi32>
    %22 = arith.cmpi slt, %0, %21 : vector<1x256xi32>
    %23 = arith.andi %20, %22 : vector<1x256xi1>
    %c8_i32_8 = arith.constant 8 : i32
    %24 = vector.broadcast %c8_i32_8 : i32 to vector<1x256xi32>
    %25 = arith.select %23, %24, %0 : vector<1x256xi1>, vector<1x256xi32>
    %c14_i32_9 = arith.constant 14 : i32
    %26 = vector.broadcast %c14_i32_9 : i32 to vector<1x256xi32>
    %27 = arith.cmpi sge, %0, %26 : vector<1x256xi32>
    %c20_i32 = arith.constant 20 : i32
    %28 = vector.broadcast %c20_i32 : i32 to vector<1x256xi32>
    %29 = arith.cmpi slt, %0, %28 : vector<1x256xi32>
    %30 = arith.andi %27, %29 : vector<1x256xi1>
    %c9_i32 = arith.constant 9 : i32
    %31 = vector.broadcast %c9_i32 : i32 to vector<1x256xi32>
    %32 = arith.select %30, %31, %25 : vector<1x256xi1>, vector<1x256xi32>
    %33 = vector.broadcast %32 : vector<1x256xi32> to vector<16x256xi32>
    %34 = arith.cmpi eq, %5, %33 : vector<16x256xi32>
    %cst_10 = arith.constant 0.000000e+00 : f32
    %35 = vector.broadcast %cst_10 : f32 to vector<16x256xf32>
    %36 = arith.select %34, %9, %35 : vector<16x256xi1>, vector<16x256xf32>
    %cst_11 = arith.constant dense<0.000000e+00> : vector<256xf32>
    %37 = vector.multi_reduction <add>, %36, %cst_11 [0] : vector<16x256xf32> to vector<256xf32>
    %38 = vector.shape_cast %37 : vector<256xf32> to vector<1x256xf32>
    %39 = arith.subf %38, %18 : vector<1x256xf32>
    %c8_i32_12 = arith.constant 8 : i32
    %40 = vector.broadcast %c8_i32_12 : i32 to vector<1x256xi32>
    %41 = arith.cmpi sge, %0, %40 : vector<1x256xi32>
    %c14_i32_13 = arith.constant 14 : i32
    %42 = vector.broadcast %c14_i32_13 : i32 to vector<1x256xi32>
    %43 = arith.cmpi slt, %0, %42 : vector<1x256xi32>
    %44 = arith.andi %41, %43 : vector<1x256xi1>
    %45 = vector.extract_strided_slice %3 {offsets = [16, 0], sizes = [128, 256], strides = [1, 1]} : vector<272x256xf32> to vector<128x256xf32>
    %c0_14 = arith.constant 0 : index
    %c0_15 = arith.constant 0 : index
    %46 = vector.load %arg4[%c0_14, %c0_15] : memref<8x128xf32, #tpu.memory_space<vmem>>, vector<8x128xf32>
    %cst_16 = arith.constant dense<0.000000e+00> : vector<8x256xf32>
    %47 = tpu.matmul %46, %45, %cst_16 {dimension_numbers = #tpu.dot_dimension_numbers<[1], [0], [0], [1], [0, 0, 1, 1], [], []>} : vector<8x128xf32>, vector<128x256xf32>, vector<8x256xf32> -> vector<8x256xf32>
    %48 = tpu.iota {dimensions = array<i32: 0>} : vector<8x256xi32>
    %c6_i32 = arith.constant 6 : i32
    %49 = vector.broadcast %c6_i32 : i32 to vector<8x256xi32>
    %50 = arith.cmpi slt, %48, %49 : vector<8x256xi32>
    %cst_17 = arith.constant -1.000000e+30 : f32
    %51 = vector.broadcast %cst_17 : f32 to vector<8x256xf32>
    %52 = arith.select %50, %47, %51 : vector<8x256xi1>, vector<8x256xf32>
    %cst_18 = arith.constant dense<0xFF800000> : vector<256xf32>
    %53 = vector.multi_reduction <maximumf>, %52, %cst_18 [0] : vector<8x256xf32> to vector<256xf32>
    %54 = vector.shape_cast %53 : vector<256xf32> to vector<1x256xf32>
    %55 = vector.broadcast %54 : vector<1x256xf32> to vector<8x256xf32>
    %56 = arith.subf %52, %55 : vector<8x256xf32>
    %57 = math.exp %56 : vector<8x256xf32>
    %cst_19 = arith.constant dense<0.000000e+00> : vector<256xf32>
    %58 = vector.multi_reduction <add>, %57, %cst_19 [0] : vector<8x256xf32> to vector<256xf32>
    %59 = vector.shape_cast %58 : vector<256xf32> to vector<1x256xf32>
    %60 = math.log %59 : vector<1x256xf32>
    %61 = arith.addf %54, %60 : vector<1x256xf32>
    %c8_i32_20 = arith.constant 8 : i32
    %62 = vector.broadcast %c8_i32_20 : i32 to vector<1x256xi32>
    %63 = arith.subi %0, %62 : vector<1x256xi32>
    %c0_i32 = arith.constant 0 : i32
    %c5_i32 = arith.constant 5 : i32
    %64 = vector.broadcast %c0_i32 : i32 to vector<1x256xi32>
    %65 = arith.maxsi %64, %63 : vector<1x256xi32>
    %66 = vector.broadcast %c5_i32 : i32 to vector<1x256xi32>
    %67 = arith.minsi %66, %65 : vector<1x256xi32>
    %68 = vector.broadcast %67 : vector<1x256xi32> to vector<8x256xi32>
    %69 = arith.cmpi eq, %48, %68 : vector<8x256xi32>
    %cst_21 = arith.constant 0.000000e+00 : f32
    %70 = vector.broadcast %cst_21 : f32 to vector<8x256xf32>
    %71 = arith.select %69, %52, %70 : vector<8x256xi1>, vector<8x256xf32>
    %cst_22 = arith.constant dense<0.000000e+00> : vector<256xf32>
    %72 = vector.multi_reduction <add>, %71, %cst_22 [0] : vector<8x256xf32> to vector<256xf32>
    %73 = vector.shape_cast %72 : vector<256xf32> to vector<1x256xf32>
    %74 = arith.subf %73, %61 : vector<1x256xf32>
    %cst_23 = arith.constant 0.000000e+00 : f32
    %75 = vector.broadcast %cst_23 : f32 to vector<1x256xf32>
    %76 = arith.select %44, %74, %75 : vector<1x256xi1>, vector<1x256xf32>
    %77 = arith.addf %39, %76 : vector<1x256xf32>
    %c14_i32_24 = arith.constant 14 : i32
    %78 = vector.broadcast %c14_i32_24 : i32 to vector<1x256xi32>
    %79 = arith.cmpi sge, %0, %78 : vector<1x256xi32>
    %c20_i32_25 = arith.constant 20 : i32
    %80 = vector.broadcast %c20_i32_25 : i32 to vector<1x256xi32>
    %81 = arith.cmpi slt, %0, %80 : vector<1x256xi32>
    %82 = arith.andi %79, %81 : vector<1x256xi1>
    %83 = vector.extract_strided_slice %3 {offsets = [144, 0], sizes = [128, 256], strides = [1, 1]} : vector<272x256xf32> to vector<128x256xf32>
    %c0_26 = arith.constant 0 : index
    %c0_27 = arith.constant 0 : index
    %84 = vector.load %arg5[%c0_26, %c0_27] : memref<8x128xf32, #tpu.memory_space<vmem>>, vector<8x128xf32>
    %cst_28 = arith.constant dense<0.000000e+00> : vector<8x256xf32>
    %85 = tpu.matmul %84, %83, %cst_28 {dimension_numbers = #tpu.dot_dimension_numbers<[1], [0], [0], [1], [0, 0, 1, 1], [], []>} : vector<8x128xf32>, vector<128x256xf32>, vector<8x256xf32> -> vector<8x256xf32>
    %86 = tpu.iota {dimensions = array<i32: 0>} : vector<8x256xi32>
    %c6_i32_29 = arith.constant 6 : i32
    %87 = vector.broadcast %c6_i32_29 : i32 to vector<8x256xi32>
    %88 = arith.cmpi slt, %86, %87 : vector<8x256xi32>
    %cst_30 = arith.constant -1.000000e+30 : f32
    %89 = vector.broadcast %cst_30 : f32 to vector<8x256xf32>
    %90 = arith.select %88, %85, %89 : vector<8x256xi1>, vector<8x256xf32>
    %cst_31 = arith.constant dense<0xFF800000> : vector<256xf32>
    %91 = vector.multi_reduction <maximumf>, %90, %cst_31 [0] : vector<8x256xf32> to vector<256xf32>
    %92 = vector.shape_cast %91 : vector<256xf32> to vector<1x256xf32>
    %93 = vector.broadcast %92 : vector<1x256xf32> to vector<8x256xf32>
    %94 = arith.subf %90, %93 : vector<8x256xf32>
    %95 = math.exp %94 : vector<8x256xf32>
    %cst_32 = arith.constant dense<0.000000e+00> : vector<256xf32>
    %96 = vector.multi_reduction <add>, %95, %cst_32 [0] : vector<8x256xf32> to vector<256xf32>
    %97 = vector.shape_cast %96 : vector<256xf32> to vector<1x256xf32>
    %98 = math.log %97 : vector<1x256xf32>
    %99 = arith.addf %92, %98 : vector<1x256xf32>
    %c14_i32_33 = arith.constant 14 : i32
    %100 = vector.broadcast %c14_i32_33 : i32 to vector<1x256xi32>
    %101 = arith.subi %0, %100 : vector<1x256xi32>
    %c0_i32_34 = arith.constant 0 : i32
    %c5_i32_35 = arith.constant 5 : i32
    %102 = vector.broadcast %c0_i32_34 : i32 to vector<1x256xi32>
    %103 = arith.maxsi %102, %101 : vector<1x256xi32>
    %104 = vector.broadcast %c5_i32_35 : i32 to vector<1x256xi32>
    %105 = arith.minsi %104, %103 : vector<1x256xi32>
    %106 = vector.broadcast %105 : vector<1x256xi32> to vector<8x256xi32>
    %107 = arith.cmpi eq, %86, %106 : vector<8x256xi32>
    %cst_36 = arith.constant 0.000000e+00 : f32
    %108 = vector.broadcast %cst_36 : f32 to vector<8x256xf32>
    %109 = arith.select %107, %90, %108 : vector<8x256xi1>, vector<8x256xf32>
    %cst_37 = arith.constant dense<0.000000e+00> : vector<256xf32>
    %110 = vector.multi_reduction <add>, %109, %cst_37 [0] : vector<8x256xf32> to vector<256xf32>
    %111 = vector.shape_cast %110 : vector<256xf32> to vector<1x256xf32>
    %112 = arith.subf %111, %99 : vector<1x256xf32>
    %cst_38 = arith.constant 0.000000e+00 : f32
    %113 = vector.broadcast %cst_38 : f32 to vector<1x256xf32>
    %114 = arith.select %82, %112, %113 : vector<1x256xi1>, vector<1x256xf32>
    %115 = arith.addf %77, %114 : vector<1x256xf32>
    %c0_39 = arith.constant 0 : index
    %c0_40 = arith.constant 0 : index
    %116 = vector.load %arg6[%c0_39, %c0_40] : memref<1x256xf32, #tpu.memory_space<vmem>>, vector<1x256xf32>
    tpu.vector_store %arg6[%c0_39, %c0_40], %115 {strides = array<i32>} : memref<1x256xf32, #tpu.memory_space<vmem>>, vector<1x256xf32>,
    return
  }
  func.func @transform_0(%arg0: i32) -> (i32, i32) {
    %c0_i32 = arith.constant 0 : i32
    %c0_i32_0 = arith.constant 0 : i32
    return %arg0, %c0_i32 : i32, i32
  }
  func.func @transform_1(%arg0: i32) -> (i32, i32) {
    %c0_i32 = arith.constant 0 : i32
    %c0_i32_0 = arith.constant 0 : i32
    return %c0_i32, %arg0 : i32, i32
  }
  func.func @transform_2(%arg0: i32) -> (i32, i32) {
    %c0_i32 = arith.constant 0 : i32
    %c0_i32_0 = arith.constant 0 : i32
    %c0_i32_1 = arith.constant 0 : i32
    return %c0_i32, %c0_i32_0 : i32, i32
  }
  func.func @transform_3(%arg0: i32) -> (i32, i32) {
    %c0_i32 = arith.constant 0 : i32
    %c0_i32_0 = arith.constant 0 : i32
    %c0_i32_1 = arith.constant 0 : i32
    return %c0_i32, %c0_i32_0 : i32, i32
  }
  func.func @transform_4(%arg0: i32) -> (i32, i32) {
    %c0_i32 = arith.constant 0 : i32
    %c0_i32_0 = arith.constant 0 : i32
    %c0_i32_1 = arith.constant 0 : i32
    return %c0_i32, %c0_i32_0 : i32, i32
  }
  func.func @transform_5(%arg0: i32) -> (i32, i32) {
    %c0_i32 = arith.constant 0 : i32
    %c0_i32_0 = arith.constant 0 : i32
    return %c0_i32, %arg0 : i32, i32
  }
}

</mosaic_0001>

<llo_original>
// kernel: tpu_custom_call.1
$region0: #{tpu_custom_call.1}
  #allocation0 [shape = 'u32[]', space=smem, size = 0x4, offset = 0x4, fixed_abs, tag = 'smem constant byte address 0x4 - core index']
  #allocation1 [shape = 'u32[144,128]{1,0:T(1,128)}', space=vmem, size = 0x12000, scoped, tag = 'internal scratch']
  %s0 = inlined_call_operand.hbm [shape: f32[512,128], index: 0, kind: input, shape index: {}]
  %s1 = inlined_call_operand.hbm [shape: s32[1,512], index: 1, kind: input, shape index: {}]
  %s2 = inlined_call_operand.hbm [shape: f32[272,128], index: 2, kind: input, shape index: {}]
  %s3 = inlined_call_operand.vmem [shape: f32[8,128], index: 3, kind: input, shape index: {}]
  %s4 = inlined_call_operand.hbm [shape: f32[8,128], index: 4, kind: input, shape index: {}]
  %s5 = inlined_call_operand.hbm [shape: f32[1,512], index: 5, kind: output, shape index: {}]
  %s6 = sld [smem:[#allocation0]]
  $region69: #{tpu_custom_call.1} parent=0
    _
  %s8 = ssub.s32 1, %s6
  %s9 = scalar_select 0, %s8, %s6
  $region1: #{tpu_custom_call.1} parent=0
    #allocation2 [shape = 'u8[262144]{0}', space=vmem, size = 0x40000, scoped, tag = 'input window, operand 0']
    #allocation3 [shape = 's32[2]{0}', space=sflag, size = 0x8, scoped, tag = 'scoped memory for tpu_custom_call.1']
    #allocation4 [shape = 's32[2]{0}', space=sflag, size = 0x8, scoped, tag = 'scoped memory for tpu_custom_call.1']
    #allocation5 [shape = 'u8[2048]{0}', space=vmem, size = 0x800, scoped, tag = 'input window, operand 1']
    #allocation6 [shape = 's32[2]{0}', space=sflag, size = 0x8, scoped, tag = 'scoped memory for tpu_custom_call.1']
    #allocation7 [shape = 'u8[139264]{0}', space=vmem, size = 0x22000, scoped, tag = 'input window, operand 2, single buffered']
    #allocation8 [shape = 'u8[4096]{0}', space=vmem, size = 0x1000, scoped, tag = 'input window, operand 4, single buffered']
    #allocation9 [shape = 's32[1]{0}', space=sflag, size = 0x4, scoped, tag = 'scoped memory for tpu_custom_call.1']
    #allocation10 [shape = 'u8[2048]{0}', space=vmem, size = 0x800, scoped, tag = 'output window, operand 0']
    %10 = vsyncpa [#allocation3], 0
    %s11 = scalar_lea.sflag [#allocation3], 1
    %12 = vsyncpa %s11, 0
    %13 = vsyncpa [#allocation6], 0
    %s14 = scalar_lea.sflag [#allocation6], 1
    %15 = vsyncpa %s14, 0
    %16 = vsyncpa [#allocation9], 0
    %17 = vsyncpa [#allocation4], 0
    %s18 = scalar_lea.sflag [#allocation4], 1
    %19 = vsyncpa %s18, 0
    loop: start=0, step=1, limit=4
    $region2: #{tpu_custom_call.1} parent=1 // loop_pre_header
      _
    $region3: #{tpu_custom_call.1} parent=1 // loop_header
      %s21 = sphi 0, %s25
      %p22 = scmp.ge.s32.totalorder %s21, 4
      %s31 = sphi 0, %s33
      %s34 = sphi 0, %s31
      %s35 = sphi 0, %s34
      %s51 = sphi 0, %s35
      %s57 = sphi 0, %s59
      %s60 = sphi 0, %s57
      %s61 = sphi 0, %s60
      %s77 = sphi 0, %s61
      %s81 = sphi 0, %s81
      %s83 = sphi 0, %s81
      %s84 = sphi 0, %s83
      %s98 = sphi 0, %s84
      %s102 = sphi 0, %s102
      %s104 = sphi 0, %s102
      %s105 = sphi 0, %s104
      %s119 = sphi 0, %s105
      %s123 = sphi 0, %s123
      %s125 = sphi 0, %s123
      %s126 = sphi 0, %s125
      %s140 = sphi 0, %s126
      %s146 = sphi 0, %s148
      %s149 = sphi 0, %s146
      %s150 = sphi 0, %s149
      %s166 = sphi 0, %s150
    $region4: #{tpu_custom_call.1} parent=1 // loop_header_branch
      %24 = sbr.rel (%p22) target = $region8
    $region5: #{tpu_custom_call.1} parent=1 // loop_body
      %s26 = ssub.s32 %s21, 1
      %s27 = ssub.s32 %s21, 2
      %s28 = sadd.s32 %s21, 1
      %s29 = ssub.s32 %s21, %s28
      %p30 = scmp.eq.s32.totalorder %s29, 0
      %s32 = sadd.s32 %s31, 1
      %s33 = scalar_select %p30, %s31, %s32
      %p36 = pneg %p30
      %p37 = scmp.eq.s32.totalorder %s21, 1
      %p38 = por %p36, %p37
      %p39 = scmp.ne.s32.totalorder %s31, %s34
      %p40 = scmp.eq.s32.totalorder %s21, 0
      %p41 = por %p39, %p40
      %p42 = scmp.ne.s32.totalorder %s31, %s34
      %p43 = scmp.eq.s32.totalorder %s26, 1
      %p44 = por %p42, %p43
      %p45 = scmp.ne.s32.totalorder %s34, %s35
      %p46 = scmp.eq.s32.totalorder %s26, 0
      %p47 = por %p45, %p46
      %p48 = scmp.ne.s32.totalorder %s34, %s35
      %p49 = scmp.eq.s32.totalorder %s27, 1
      %p50 = por %p48, %p49
      %p52 = scmp.ne.s32.totalorder %s35, %s51
      %p53 = scmp.eq.s32.totalorder %s27, 0
      %p54 = por %p52, %p53
      %s55 = ssub.s32 %s21, %s28
      %p56 = scmp.eq.s32.totalorder %s55, 0
      %s58 = sadd.s32 %s57, 1
      %s59 = scalar_select %p56, %s57, %s58
      %p62 = pneg %p56
      %p63 = scmp.eq.s32.totalorder %s21, 1
      %p64 = por %p62, %p63
      %p65 = scmp.ne.s32.totalorder %s57, %s60
      %p66 = scmp.eq.s32.totalorder %s21, 0
      %p67 = por %p65, %p66
      %p68 = scmp.ne.s32.totalorder %s57, %s60
      %p69 = scmp.eq.s32.totalorder %s26, 1
      %p70 = por %p68, %p69
      %p71 = scmp.ne.s32.totalorder %s60, %s61
      %p72 = scmp.eq.s32.totalorder %s26, 0
      %p73 = por %p71, %p72
      %p74 = scmp.ne.s32.totalorder %s60, %s61
      %p75 = scmp.eq.s32.totalorder %s27, 1
      %p76 = por %p74, %p75
      %p78 = scmp.ne.s32.totalorder %s61, %s77
      %p79 = scmp.eq.s32.totalorder %s27, 0
      %p80 = por %p78, %p79
      %s82 = sadd.s32 %s81, 1
      %p85 = scmp.eq.s32.totalorder %s21, 1
      %p86 = scmp.ne.s32.totalorder %s81, %s83
      %p87 = scmp.eq.s32.totalorder %s21, 0
      %p88 = por %p86, %p87
      %p89 = scmp.ne.s32.totalorder %s81, %s83
      %p90 = scmp.eq.s32.totalorder %s26, 1
      %p91 = por %p89, %p90
      %p92 = scmp.ne.s32.totalorder %s83, %s84
      %p93 = scmp.eq.s32.totalorder %s26, 0
      %p94 = por %p92, %p93
      %p95 = scmp.ne.s32.totalorder %s83, %s84
      %p96 = scmp.eq.s32.totalorder %s27, 1
      %p97 = por %p95, %p96
      %p99 = scmp.ne.s32.totalorder %s84, %s98
      %p100 = scmp.eq.s32.totalorder %s27, 0
      %p101 = por %p99, %p100
      %s103 = sadd.s32 %s102, 1
      %p106 = scmp.eq.s32.totalorder %s21, 1
      %p107 = scmp.ne.s32.totalorder %s102, %s104
      %p108 = scmp.eq.s32.totalorder %s21, 0
      %p109 = por %p107, %p108
      %p110 = scmp.ne.s32.totalorder %s102, %s104
      %p111 = scmp.eq.s32.totalorder %s26, 1
      %p112 = por %p110, %p111
      %p113 = scmp.ne.s32.totalorder %s104, %s105
      %p114 = scmp.eq.s32.totalorder %s26, 0
      %p115 = por %p113, %p114
      %p116 = scmp.ne.s32.totalorder %s104, %s105
      %p117 = scmp.eq.s32.totalorder %s27, 1
      %p118 = por %p116, %p117
      %p120 = scmp.ne.s32.totalorder %s105, %s119
      %p121 = scmp.eq.s32.totalorder %s27, 0
      %p122 = por %p120, %p121
      %s124 = sadd.s32 %s123, 1
      %p127 = scmp.eq.s32.totalorder %s21, 1
      %p128 = scmp.ne.s32.totalorder %s123, %s125
      %p129 = scmp.eq.s32.totalorder %s21, 0
      %p130 = por %p128, %p129
      %p131 = scmp.ne.s32.totalorder %s123, %s125
      %p132 = scmp.eq.s32.totalorder %s26, 1
      %p133 = por %p131, %p132
      %p134 = scmp.ne.s32.totalorder %s125, %s126
      %p135 = scmp.eq.s32.totalorder %s26, 0
      %p136 = por %p134, %p135
      %p137 = scmp.ne.s32.totalorder %s125, %s126
      %p138 = scmp.eq.s32.totalorder %s27, 1
      %p139 = por %p137, %p138
      %p141 = scmp.ne.s32.totalorder %s126, %s140
      %p142 = scmp.eq.s32.totalorder %s27, 0
      %p143 = por %p141, %p142
      %s144 = ssub.s32 %s21, %s28
      %p145 = scmp.eq.s32.totalorder %s144, 0
      %s147 = sadd.s32 %s146, 1
      %s148 = scalar_select %p145, %s146, %s147
      %p151 = pneg %p145
      %p152 = scmp.eq.s32.totalorder %s21, 1
      %p153 = por %p151, %p152
      %p154 = scmp.ne.s32.totalorder %s146, %s149
      %p155 = scmp.eq.s32.totalorder %s21, 0
      %p156 = por %p154, %p155
      %p157 = scmp.ne.s32.totalorder %s146, %s149
      %p158 = scmp.eq.s32.totalorder %s26, 1
      %p159 = por %p157, %p158
      %p160 = scmp.ne.s32.totalorder %s149, %s150
      %p161 = scmp.eq.s32.totalorder %s26, 0
      %p162 = por %p160, %p161
      %p163 = scmp.ne.s32.totalorder %s149, %s150
      %p164 = scmp.eq.s32.totalorder %s27, 1
      %p165 = por %p163, %p164
      %p167 = scmp.ne.s32.totalorder %s150, %s166
      %p168 = scmp.eq.s32.totalorder %s27, 0
      %p169 = por %p167, %p168
      %p170 = scmp.le.s32.totalorder 1, %s21
      %p171 = scmp.lt.s32.totalorder %s21, 3
      %p172 = pnand %p170, %p171
      %p173 = pneg %p172
      // Predicated region
      $region9: #{tpu_custom_call.1} parent=5 // pred_check
        _
      $region10: #{tpu_custom_call.1} parent=5 // pred_check_branch
        %175 = sbr.rel (%p172) target = $region12
      $region11: #{tpu_custom_call.1} parent=5 // pred_region
        %s176 = ssub.s32 %s21, 1
        // Predicated region
        $region13: #{tpu_custom_call.1} parent=11 // pred_check
          %p177 = pneg %p94
        $region14: #{tpu_custom_call.1} parent=11 // pred_check_branch
          %179 = sbr.rel (%p177) target = $region16
        $region15: #{tpu_custom_call.1} parent=11 // pred_region
          %s181 = ssub.s32 4352, 4352
          %182 = vsyncadd [#allocation6], %s181
          %s183 = sshll.u32 [#allocation7], 4
          %s184 = int_to_ptr.vmem [resolvable:$true] %s183
          %189 = dma.hbm_to_vmem [thread:$0]  %s2, 4352, %s184, [#allocation6], 128, 128, 8
        $region16: #{tpu_custom_call.1} parent=11 // pred_fallthru
          _
        // Predicated region
        $region17: #{tpu_custom_call.1} parent=11 // pred_check
          %p190 = pneg %p115
        $region18: #{tpu_custom_call.1} parent=11 // pred_check_branch
          %192 = sbr.rel (%p190) target = $region20
        $region19: #{tpu_custom_call.1} parent=11 // pred_region
          _
        $region20: #{tpu_custom_call.1} parent=11 // pred_fallthru
          _
        // Predicated region
        $region21: #{tpu_custom_call.1} parent=11 // pred_check
          %p193 = pneg %p136
        $region22: #{tpu_custom_call.1} parent=11 // pred_check_branch
          %195 = sbr.rel (%p193) target = $region24
        $region23: #{tpu_custom_call.1} parent=11 // pred_region
          %s197 = ssub.s32 128, 128
          %198 = vsyncadd [#allocation9], %s197
          %s200 = sshll.u32 [#allocation8], 4
          %s201 = int_to_ptr.vmem [resolvable:$true] %s200
          %203 = dma.hbm_to_vmem [thread:$0]  %s4, 128, %s201, [#allocation9]
        $region24: #{tpu_custom_call.1} parent=11 // pred_fallthru
          _
      $region12: #{tpu_custom_call.1} parent=5 // pred_fallthru
        _
      %p204 = scmp.lt.s32.totalorder %s21, 2
      // Predicated region
      $region25: #{tpu_custom_call.1} parent=5 // pred_check
        %p205 = pneg %p204
      $region26: #{tpu_custom_call.1} parent=5 // pred_check_branch
        %207 = sbr.rel (%p205) target = $region28
      $region27: #{tpu_custom_call.1} parent=5 // pred_region
        // Predicated region
        $region29: #{tpu_custom_call.1} parent=27 // pred_check
          %p208 = pneg %p41
        $region30: #{tpu_custom_call.1} parent=27 // pred_check_branch
          %210 = sbr.rel (%p208) target = $region32
        $region31: #{tpu_custom_call.1} parent=27 // pred_region
          %s211 = sand.u32 %s31, 1
          %s212 = scalar_lea.sflag [#allocation3], %s211
          %s213 = sand.u32 %s31, 1
          %s214 = smul.addr %s213, 256
          %s215 = scalar_lea.vmem [#allocation2], %s214
          %s216 = smul.u32 32, %s21
          %s218 = ssub.s32 4096, 4096
          %219 = vsyncadd %s212, %s218
          %s220 = smul.addr %s216, 128
          %s221 = scalar_lea.hbm %s0, %s220
          %s222 = sshll.u32 %s215, 4
          %s223 = int_to_ptr.vmem [resolvable:$true] %s222
          %228 = dma.hbm_to_vmem [thread:$0]  %s221, 4096, %s223, %s212, 128, 128, 8
        $region32: #{tpu_custom_call.1} parent=27 // pred_fallthru
          _
        // Predicated region
        $region33: #{tpu_custom_call.1} parent=27 // pred_check
          %p229 = pneg %p67
        $region34: #{tpu_custom_call.1} parent=27 // pred_check_branch
          %231 = sbr.rel (%p229) target = $region36
        $region35: #{tpu_custom_call.1} parent=27 // pred_region
          %s232 = sand.u32 %s21, 1
          %s233 = scalar_lea.sflag [#allocation6], %s232
          %s234 = sand.u32 %s57, 1
          %s235 = smul.addr %s234, 2
          %s236 = scalar_lea.vmem [#allocation5], %s235
          %s237 = smul.u32 2, %s21
          %s239 = ssub.s32 32, 32
          %240 = vsyncadd %s233, %s239
          %s241 = smul.addr %s237, 16
          %s242 = scalar_lea.hbm %s1, %s241
          %s244 = sshll.u32 %s236, 4
          %s245 = int_to_ptr.vmem [resolvable:$true] %s244
          %247 = dma.hbm_to_vmem [thread:$0]  %s242, 32, %s245, %s233
        $region36: #{tpu_custom_call.1} parent=27 // pred_fallthru
          _
      $region28: #{tpu_custom_call.1} parent=5 // pred_fallthru
        _
      %p248 = scmp.le.s32.totalorder 1, %s21
      %p249 = scmp.lt.s32.totalorder %s21, 3
      %p250 = pnand %p248, %p249
      %p251 = pneg %p250
      // Predicated region
      $region37: #{tpu_custom_call.1} parent=5 // pred_check
        _
      $region38: #{tpu_custom_call.1} parent=5 // pred_check_branch
        %253 = sbr.rel (%p250) target = $region40
      $region39: #{tpu_custom_call.1} parent=5 // pred_region
        %s254 = ssub.s32 %s21, 1
        %s255 = sand.u32 %s34, 1
        %s256 = scalar_lea.sflag [#allocation3], %s255
        %s257 = sand.u32 %s34, 1
        %s258 = smul.addr %s257, 256
        %s259 = scalar_lea.vmem [#allocation2], %s258
        // Predicated region
        $region41: #{tpu_custom_call.1} parent=39 // pred_check
          %p260 = pneg %p47
        $region42: #{tpu_custom_call.1} parent=39 // pred_check_branch
          %262 = sbr.rel (%p260) target = $region44
        $region43: #{tpu_custom_call.1} parent=39 // pred_region
          %263 = dma.done %s256, 4096
        $region44: #{tpu_custom_call.1} parent=39 // pred_fallthru
          _
        %s264 = sand.u32 %s26, 1
        %s265 = scalar_lea.sflag [#allocation6], %s264
        %s266 = sand.u32 %s60, 1
        %s267 = smul.addr %s266, 2
        %s268 = scalar_lea.vmem [#allocation5], %s267
        // Predicated region
        $region45: #{tpu_custom_call.1} parent=39 // pred_check
          %p269 = pneg %p73
        $region46: #{tpu_custom_call.1} parent=39 // pred_check_branch
          %271 = sbr.rel (%p269) target = $region48
        $region47: #{tpu_custom_call.1} parent=39 // pred_region
          %272 = dma.done %s265, 32
        $region48: #{tpu_custom_call.1} parent=39 // pred_fallthru
          _
        // Predicated region
        $region49: #{tpu_custom_call.1} parent=39 // pred_check
          %p273 = pneg %p94
        $region50: #{tpu_custom_call.1} parent=39 // pred_check_branch
          %275 = sbr.rel (%p273) target = $region52
        $region51: #{tpu_custom_call.1} parent=39 // pred_region
          %276 = dma.done [#allocation6], 4352
        $region52: #{tpu_custom_call.1} parent=39 // pred_fallthru
          _
        // Predicated region
        $region53: #{tpu_custom_call.1} parent=39 // pred_check
          %p277 = pneg %p136
        $region54: #{tpu_custom_call.1} parent=39 // pred_check_branch
          %279 = sbr.rel (%p277) target = $region56
        $region55: #{tpu_custom_call.1} parent=39 // pred_region
          %280 = dma.done [#allocation9], 128
        $region56: #{tpu_custom_call.1} parent=39 // pred_fallthru
          _
        %s281 = sand.u32 %s34, 1
        %s282 = scalar_lea.sflag [#allocation3], %s281
        %s283 = sand.u32 %s34, 1
        %s284 = smul.addr %s283, 256
        %s285 = scalar_lea.vmem [#allocation2], %s284
        %p286 = pneg %p47
        %p287 = pneg %p44
        %s288 = sand.u32 %s26, 1
        %s289 = scalar_lea.sflag [#allocation6], %s288
        %s290 = sand.u32 %s60, 1
        %s291 = smul.addr %s290, 2
        %s292 = scalar_lea.vmem [#allocation5], %s291
        %p293 = pneg %p73
        %p294 = pneg %p70
        %p295 = pneg %p94
        %p296 = pneg %p91
        %p297 = pneg %p115
        %p298 = pneg %p112
        %p299 = pneg %p136
        %p300 = pneg %p133
        %p301 = pneg %p162
        %p302 = pneg %p159
        %s303 = sand.u32 %s149, 1
        %s304 = scalar_lea.sflag [#allocation4], %s303
        %s305 = sand.u32 %s149, 1
        %s306 = smul.addr %s305, 2
        %s307 = scalar_lea.vmem [#allocation10], %s306
        %s308 = smul.u32 32, %s26
        %s309 = smul.u32 2, %s26
        %s310 = smul.u32 2, %s26
        %v311 = vld [vmem:[%s268] sm:$0x3]
        %v312 = vld [vmem:[#allocation7] sm:$0xff]
        %v313 = vld [vmem:[#allocation7 + $0x8] sm:$0xff]
        %v314 = vld [vmem:[#allocation7 + $0x10] sm:$0xff]
        %v315 = vld [vmem:[#allocation7 + $0x18] sm:$0xff]
        %v316 = vld [vmem:[#allocation7 + $0x20] sm:$0xff]
        %v317 = vld [vmem:[#allocation7 + $0x28] sm:$0xff]
        %v318 = vld [vmem:[#allocation7 + $0x30] sm:$0xff]
        %v319 = vld [vmem:[#allocation7 + $0x38] sm:$0xff]
        %v320 = vld [vmem:[#allocation7 + $0x40] sm:$0xff]
        %v321 = vld [vmem:[#allocation7 + $0x48] sm:$0xff]
        %v322 = vld [vmem:[#allocation7 + $0x50] sm:$0xff]
        %v323 = vld [vmem:[#allocation7 + $0x58] sm:$0xff]
        %v324 = vld [vmem:[#allocation7 + $0x60] sm:$0xff]
        %v325 = vld [vmem:[#allocation7 + $0x68] sm:$0xff]
        %v326 = vld [vmem:[#allocation7 + $0x70] sm:$0xff]
        %v327 = vld [vmem:[#allocation7 + $0x78] sm:$0xff]
        %v328 = vld [vmem:[#allocation7 + $0x80] sm:$0xff]
        %v329 = vld [vmem:[#allocation7 + $0x88] sm:$0xff]
        %v330 = vld [vmem:[#allocation7 + $0x90] sm:$0xff]
        %v331 = vld [vmem:[#allocation7 + $0x98] sm:$0xff]
        %v332 = vld [vmem:[#allocation7 + $0xa0] sm:$0xff]
        %v333 = vld [vmem:[#allocation7 + $0xa8] sm:$0xff]
        %v334 = vld [vmem:[#allocation7 + $0xb0] sm:$0xff]
        %v335 = vld [vmem:[#allocation7 + $0xb8] sm:$0xff]
        %v336 = vld [vmem:[#allocation7 + $0xc0] sm:$0xff]
        %v337 = vld [vmem:[#allocation7 + $0xc8] sm:$0xff]
        %v338 = vld [vmem:[#allocation7 + $0xd0] sm:$0xff]
        %v339 = vld [vmem:[#allocation7 + $0xd8] sm:$0xff]
        %v340 = vld [vmem:[#allocation7 + $0xe0] sm:$0xff]
        %v341 = vld [vmem:[#allocation7 + $0xe8] sm:$0xff]
        %v342 = vld [vmem:[#allocation7 + $0xf0] sm:$0xff]
        %v343 = vld [vmem:[#allocation7 + $0xf8] sm:$0xff]
        %v344 = vld [vmem:[#allocation7 + $0x100] sm:$0xff]
        %v345 = vld [vmem:[#allocation7 + $0x108] sm:$0xff]
        %v346 = vld [vmem:[%s259] sm:$0xff]
        %v347 = vld [vmem:[%s259 + $0x8] sm:$0xff]
        %v348 = vld [vmem:[%s259 + $0x10] sm:$0xff]
        %v349 = vld [vmem:[%s259 + $0x18] sm:$0xff]
        %v350 = vld [vmem:[%s259 + $0x20] sm:$0xff]
        %v351 = vld [vmem:[%s259 + $0x28] sm:$0xff]
        %v352 = vld [vmem:[%s259 + $0x30] sm:$0xff]
        %v353 = vld [vmem:[%s259 + $0x38] sm:$0xff]
        %v354 = vld [vmem:[%s259 + $0x40] sm:$0xff]
        %v355 = vld [vmem:[%s259 + $0x48] sm:$0xff]
        %v356 = vld [vmem:[%s259 + $0x50] sm:$0xff]
        %v357 = vld [vmem:[%s259 + $0x58] sm:$0xff]
        %v358 = vld [vmem:[%s259 + $0x60] sm:$0xff]
        %v359 = vld [vmem:[%s259 + $0x68] sm:$0xff]
        %v360 = vld [vmem:[%s259 + $0x70] sm:$0xff]
        %v361 = vld [vmem:[%s259 + $0x78] sm:$0xff]
        %v362 = vld [vmem:[%s259 + $0x80] sm:$0xff]
        %v363 = vld [vmem:[%s259 + $0x88] sm:$0xff]
        %v364 = vld [vmem:[%s259 + $0x90] sm:$0xff]
        %v365 = vld [vmem:[%s259 + $0x98] sm:$0xff]
        %v366 = vld [vmem:[%s259 + $0xa0] sm:$0xff]
        %v367 = vld [vmem:[%s259 + $0xa8] sm:$0xff]
        %v368 = vld [vmem:[%s259 + $0xb0] sm:$0xff]
        %v369 = vld [vmem:[%s259 + $0xb8] sm:$0xff]
        %v370 = vld [vmem:[%s259 + $0xc0] sm:$0xff]
        %v371 = vld [vmem:[%s259 + $0xc8] sm:$0xff]
        %v372 = vld [vmem:[%s259 + $0xd0] sm:$0xff]
        %v373 = vld [vmem:[%s259 + $0xd8] sm:$0xff]
        %v374 = vld [vmem:[%s259 + $0xe0] sm:$0xff]
        %v375 = vld [vmem:[%s259 + $0xe8] sm:$0xff]
        %v376 = vld [vmem:[%s259 + $0xf0] sm:$0xff]
        %v377 = vld [vmem:[%s259 + $0xf8] sm:$0xff]
        %378 = vmatprep.subr.mxu0 0.0
        %379 = vmatpush1.xpose.msra.mxu0 %v346
        %380 = vmatprep.subr.mxu0 0.0
        %381 = vmatpush1.xpose.msra.mxu0 %v347
        %382 = vmatprep.subr.mxu0 0.0
        %383 = vmatpush1.xpose.msra.mxu0 %v348
        %384 = vmatprep.subr.mxu0 0.0
        %385 = vmatpush1.xpose.msra.mxu0 %v349
        %386 = vmatprep.subr.mxu0 0.0
        %387 = vmatpush1.xpose.msra.mxu0 %v350
        %388 = vmatprep.subr.mxu0 0.0
        %389 = vmatpush1.xpose.msra.mxu0 %v351
        %390 = vmatprep.subr.mxu0 0.0
        %391 = vmatpush1.xpose.msra.mxu0 %v352
        %392 = vmatprep.subr.mxu0 0.0
        %393 = vmatpush1.xpose.msra.mxu0 %v353
        %394 = vmatprep.subr.mxu0 0.0
        %395 = vmatpush1.xpose.msra.mxu0 %v354
        %396 = vmatprep.subr.mxu0 0.0
        %397 = vmatpush1.xpose.msra.mxu0 %v355
        %398 = vmatprep.subr.mxu0 0.0
        %399 = vmatpush1.xpose.msra.mxu0 %v356
        %400 = vmatprep.subr.mxu0 0.0
        %401 = vmatpush1.xpose.msra.mxu0 %v357
        %402 = vmatprep.subr.mxu0 0.0
        %403 = vmatpush1.xpose.msra.mxu0 %v358
        %404 = vmatprep.subr.mxu0 0.0
        %405 = vmatpush1.xpose.msra.mxu0 %v359
        %406 = vmatprep.subr.mxu0 0.0
        %407 = vmatpush1.xpose.msra.mxu0 %v360
        %408 = vmatprep.subr.mxu0 0.0
        %409 = vmatpush1.xpose.msra.mxu0 %v361
        %410 = vmatprep.subr.mxu0 0.0
        %411 = vmatpush1.xpose.msra.mxu0 %v362
        %412 = vmatprep.subr.mxu0 0.0
        %413 = vmatpush1.xpose.msra.mxu0 %v363
        %414 = vmatprep.subr.mxu0 0.0
        %415 = vmatpush1.xpose.msra.mxu0 %v364
        %416 = vmatprep.subr.mxu0 0.0
        %417 = vmatpush1.xpose.msra.mxu0 %v365
        %418 = vmatprep.subr.mxu0 0.0
        %419 = vmatpush1.xpose.msra.mxu0 %v366
        %420 = vmatprep.subr.mxu0 0.0
        %421 = vmatpush1.xpose.msra.mxu0 %v367
        %422 = vmatprep.subr.mxu0 0.0
        %423 = vmatpush1.xpose.msra.mxu0 %v368
        %424 = vmatprep.subr.mxu0 0.0
        %425 = vmatpush1.xpose.msra.mxu0 %v369
        %426 = vmatprep.subr.mxu0 0.0
        %427 = vmatpush1.xpose.msra.mxu0 %v370
        %428 = vmatprep.subr.mxu0 0.0
        %429 = vmatpush1.xpose.msra.mxu0 %v371
        %430 = vmatprep.subr.mxu0 0.0
        %431 = vmatpush1.xpose.msra.mxu0 %v372
        %432 = vmatprep.subr.mxu0 0.0
        %433 = vmatpush1.xpose.msra.mxu0 %v373
        %434 = vmatprep.subr.mxu0 0.0
        %435 = vmatpush1.xpose.msra.mxu0 %v374
        %436 = vmatprep.subr.mxu0 0.0
        %437 = vmatpush1.xpose.msra.mxu0 %v375
        %438 = vmatprep.subr.mxu0 0.0
        %439 = vmatpush1.xpose.msra.mxu0 %v376
        %440 = vmatprep.subr.mxu0 0.0
        %441 = vmatpush1.xpose.msra.mxu0 %v377
        %442 = vmatprep.mubr.f32.mxu0 0.0
        %443 = vmatmul.mubr.f32.gmra.mrb[0].mxu0 %v312
        %v444 = vpop.f32.mrb[0].mxu0
        %v445 = vadd.f32 0.0, %v444
        %v446 = vpop.f32.mrb[0].mxu0
        %v447 = vadd.f32 0.0, %v446
        %448 = vmatprep.mubr.f32.mxu0 0.0
        %449 = vmatmul.mubr.f32.gmra.mrb[0].mxu0 %v313
        %v450 = vpop.f32.mrb[0].mxu0
        %v451 = vadd.f32 0.0, %v450
        %v452 = vpop.f32.mrb[0].mxu0
        %v453 = vadd.f32 0.0, %v452
        %454 = vmatprep.mubr.f32.mxu0 0.0
        %455 = vmatmul.mubr.f32.gmra.mrb[0].mxu0 %v314
        %v456 = vpop.f32.mrb[0].mxu0
        %v457 = vadd.f32 0.0, %v456
        %v458 = vpop.f32.mrb[0].mxu0
        %v459 = vadd.f32 0.0, %v458
        %460 = vmatprep.mubr.f32.mxu0 0.0
        %461 = vmatmul.mubr.f32.gmra.mrb[0].mxu0 %v315
        %v462 = vpop.f32.mrb[0].mxu0
        %v463 = vadd.f32 0.0, %v462
        %v464 = vpop.f32.mrb[0].mxu0
        %v465 = vadd.f32 0.0, %v464
        %466 = vmatprep.mubr.f32.mxu0 0.0
        %467 = vmatmul.mubr.f32.gmra.mrb[0].mxu0 %v316
        %v468 = vpop.f32.mrb[0].mxu0
        %v469 = vadd.f32 0.0, %v468
        %v470 = vpop.f32.mrb[0].mxu0
        %v471 = vadd.f32 0.0, %v470
        %472 = vmatprep.mubr.f32.mxu0 0.0
        %473 = vmatmul.mubr.f32.gmra.mrb[0].mxu0 %v317
        %v474 = vpop.f32.mrb[0].mxu0
        %v475 = vadd.f32 0.0, %v474
        %v476 = vpop.f32.mrb[0].mxu0
        %v477 = vadd.f32 0.0, %v476
        %478 = vmatprep.mubr.f32.mxu0 0.0
        %479 = vmatmul.mubr.f32.gmra.mrb[0].mxu0 %v318
        %v480 = vpop.f32.mrb[0].mxu0
        %v481 = vadd.f32 0.0, %v480
        %v482 = vpop.f32.mrb[0].mxu0
        %v483 = vadd.f32 0.0, %v482
        %484 = vmatprep.mubr.f32.mxu0 0.0
        %485 = vmatmul.mubr.f32.gmra.mrb[0].mxu0 %v319
        %v486 = vpop.f32.mrb[0].mxu0
        %v487 = vadd.f32 0.0, %v486
        %v488 = vpop.f32.mrb[0].mxu0
        %v489 = vadd.f32 0.0, %v488
        %490 = vmatprep.mubr.f32.mxu0 0.0
        %491 = vmatmul.mubr.f32.gmra.mrb[0].mxu0 %v320
        %v492 = vpop.f32.mrb[0].mxu0
        %v493 = vadd.f32 0.0, %v492
        %v494 = vpop.f32.mrb[0].mxu0
        %v495 = vadd.f32 0.0, %v494
        %496 = vmatprep.mubr.f32.mxu0 0.0
        %497 = vmatmul.mubr.f32.gmra.mrb[0].mxu0 %v321
        %v498 = vpop.f32.mrb[0].mxu0
        %v499 = vadd.f32 0.0, %v498
        %v500 = vpop.f32.mrb[0].mxu0
        %v501 = vadd.f32 0.0, %v500
        %502 = vmatprep.mubr.f32.mxu0 0.0
        %503 = vmatmul.mubr.f32.gmra.mrb[0].mxu0 %v322
        %v504 = vpop.f32.mrb[0].mxu0
        %v505 = vadd.f32 0.0, %v504
        %v506 = vpop.f32.mrb[0].mxu0
        %v507 = vadd.f32 0.0, %v506
        %508 = vmatprep.mubr.f32.mxu0 0.0
        %509 = vmatmul.mubr.f32.gmra.mrb[0].mxu0 %v323
        %v510 = vpop.f32.mrb[0].mxu0
        %v511 = vadd.f32 0.0, %v510
        %v512 = vpop.f32.mrb[0].mxu0
        %v513 = vadd.f32 0.0, %v512
        %514 = vmatprep.mubr.f32.mxu0 0.0
        %515 = vmatmul.mubr.f32.gmra.mrb[0].mxu0 %v324
        %v516 = vpop.f32.mrb[0].mxu0
        %v517 = vadd.f32 0.0, %v516
        %v518 = vpop.f32.mrb[0].mxu0
        %v519 = vadd.f32 0.0, %v518
        %520 = vmatprep.mubr.f32.mxu0 0.0
        %521 = vmatmul.mubr.f32.gmra.mrb[0].mxu0 %v325
        %v522 = vpop.f32.mrb[0].mxu0
        %v523 = vadd.f32 0.0, %v522
        %v524 = vpop.f32.mrb[0].mxu0
        %v525 = vadd.f32 0.0, %v524
        %526 = vmatprep.mubr.f32.mxu0 0.0
        %527 = vmatmul.mubr.f32.gmra.mrb[0].mxu0 %v326
        %v528 = vpop.f32.mrb[0].mxu0
        %v529 = vadd.f32 0.0, %v528
        %v530 = vpop.f32.mrb[0].mxu0
        %v531 = vadd.f32 0.0, %v530
        %532 = vmatprep.mubr.f32.mxu0 0.0
        %533 = vmatmul.mubr.f32.gmra.mrb[0].mxu0 %v327
        %v534 = vpop.f32.mrb[0].mxu0
        %v535 = vadd.f32 0.0, %v534
        %v536 = vpop.f32.mrb[0].mxu0
        %v537 = vadd.f32 0.0, %v536
        %538 = vmatprep.mubr.f32.mxu0 0.0
        %539 = vmatmul.mubr.f32.gmra.mrb[0].mxu0 %v328
        %v540 = vpop.f32.mrb[0].mxu0
        %v541 = vadd.f32 0.0, %v540
        %v542 = vpop.f32.mrb[0].mxu0
        %v543 = vadd.f32 0.0, %v542
        %544 = vmatprep.mubr.f32.mxu0 0.0
        %545 = vmatmul.mubr.f32.gmra.mrb[0].mxu0 %v329
        %v546 = vpop.f32.mrb[0].mxu0
        %v547 = vadd.f32 0.0, %v546
        %v548 = vpop.f32.mrb[0].mxu0
        %v549 = vadd.f32 0.0, %v548
        %550 = vmatprep.mubr.f32.mxu0 0.0
        %551 = vmatmul.mubr.f32.gmra.mrb[0].mxu0 %v330
        %v552 = vpop.f32.mrb[0].mxu0
        %v553 = vadd.f32 0.0, %v552
        %v554 = vpop.f32.mrb[0].mxu0
        %v555 = vadd.f32 0.0, %v554
        %556 = vmatprep.mubr.f32.mxu0 0.0
        %557 = vmatmul.mubr.f32.gmra.mrb[0].mxu0 %v331
        %v558 = vpop.f32.mrb[0].mxu0
        %v559 = vadd.f32 0.0, %v558
        %v560 = vpop.f32.mrb[0].mxu0
        %v561 = vadd.f32 0.0, %v560
        %562 = vmatprep.mubr.f32.mxu0 0.0
        %563 = vmatmul.mubr.f32.gmra.mrb[0].mxu0 %v332
        %v564 = vpop.f32.mrb[0].mxu0
        %v565 = vadd.f32 0.0, %v564
        %v566 = vpop.f32.mrb[0].mxu0
        %v567 = vadd.f32 0.0, %v566
        %568 = vmatprep.mubr.f32.mxu0 0.0
        %569 = vmatmul.mubr.f32.gmra.mrb[0].mxu0 %v333
        %v570 = vpop.f32.mrb[0].mxu0
        %v571 = vadd.f32 0.0, %v570
        %v572 = vpop.f32.mrb[0].mxu0
        %v573 = vadd.f32 0.0, %v572
        %574 = vmatprep.mubr.f32.mxu0 0.0
        %575 = vmatmul.mubr.f32.gmra.mrb[0].mxu0 %v334
        %v576 = vpop.f32.mrb[0].mxu0
        %v577 = vadd.f32 0.0, %v576
        %v578 = vpop.f32.mrb[0].mxu0
        %v579 = vadd.f32 0.0, %v578
        %580 = vmatprep.mubr.f32.mxu0 0.0
        %581 = vmatmul.mubr.f32.gmra.mrb[0].mxu0 %v335
        %v582 = vpop.f32.mrb[0].mxu0
        %v583 = vadd.f32 0.0, %v582
        %v584 = vpop.f32.mrb[0].mxu0
        %v585 = vadd.f32 0.0, %v584
        %586 = vmatprep.mubr.f32.mxu0 0.0
        %587 = vmatmul.mubr.f32.gmra.mrb[0].mxu0 %v336
        %v588 = vpop.f32.mrb[0].mxu0
        %v589 = vadd.f32 0.0, %v588
        %v590 = vpop.f32.mrb[0].mxu0
        %v591 = vadd.f32 0.0, %v590
        %592 = vmatprep.mubr.f32.mxu0 0.0
        %593 = vmatmul.mubr.f32.gmra.mrb[0].mxu0 %v337
        %v594 = vpop.f32.mrb[0].mxu0
        %v595 = vadd.f32 0.0, %v594
        %v596 = vpop.f32.mrb[0].mxu0
        %v597 = vadd.f32 0.0, %v596
        %598 = vmatprep.mubr.f32.mxu0 0.0
        %599 = vmatmul.mubr.f32.gmra.mrb[0].mxu0 %v338
        %v600 = vpop.f32.mrb[0].mxu0
        %v601 = vadd.f32 0.0, %v600
        %v602 = vpop.f32.mrb[0].mxu0
        %v603 = vadd.f32 0.0, %v602
        %604 = vmatprep.mubr.f32.mxu0 0.0
        %605 = vmatmul.mubr.f32.gmra.mrb[0].mxu0 %v339
        %v606 = vpop.f32.mrb[0].mxu0
        %v607 = vadd.f32 0.0, %v606
        %v608 = vpop.f32.mrb[0].mxu0
        %v609 = vadd.f32 0.0, %v608
        %610 = vmatprep.mubr.f32.mxu0 0.0
        %611 = vmatmul.mubr.f32.gmra.mrb[0].mxu0 %v340
        %v612 = vpop.f32.mrb[0].mxu0
        %v613 = vadd.f32 0.0, %v612
        %v614 = vpop.f32.mrb[0].mxu0
        %v615 = vadd.f32 0.0, %v614
        %616 = vmatprep.mubr.f32.mxu0 0.0
        %617 = vmatmul.mubr.f32.gmra.mrb[0].mxu0 %v341
        %v618 = vpop.f32.mrb[0].mxu0
        %v619 = vadd.f32 0.0, %v618
        %v620 = vpop.f32.mrb[0].mxu0
        %v621 = vadd.f32 0.0, %v620
        %622 = vmatprep.mubr.f32.mxu0 0.0
        %623 = vmatmul.mubr.f32.gmra.mrb[0].mxu0 %v342
        %v624 = vpop.f32.mrb[0].mxu0
        %v625 = vadd.f32 0.0, %v624
        %v626 = vpop.f32.mrb[0].mxu0
        %v627 = vadd.f32 0.0, %v626
        %628 = vmatprep.mubr.f32.mxu0 0.0
        %629 = vmatmul.mubr.f32.gmra.mrb[0].mxu0 %v343
        %v630 = vpop.f32.mrb[0].mxu0
        %v631 = vadd.f32 0.0, %v630
        %v632 = vpop.f32.mrb[0].mxu0
        %v633 = vadd.f32 0.0, %v632
        %634 = vmatprep.mubr.f32.mxu0 0.0
        %635 = vmatmul.mubr.f32.gmra.mrb[0].mxu0 %v344
        %v636 = vpop.f32.mrb[0].mxu0
        %v637 = vadd.f32 0.0, %v636
        %v638 = vpop.f32.mrb[0].mxu0
        %v639 = vadd.f32 0.0, %v638
        %640 = vmatprep.mubr.f32.mxu0 0.0
        %641 = vmatmul.mubr.f32.gmra.mrb[0].mxu0 %v345
        %v642 = vpop.f32.mrb[0].mxu0
        %v643 = vadd.f32 0.0, %v642
        %v644 = vpop.f32.mrb[0].mxu0
        %v645 = vadd.f32 0.0, %v644
        %646 = vdwg.mxu0
        %v647 = vlaneseq
        %v648 = vshrl.u32 %v647, 7
        %v649 = vadd.s32 %v648, 8
        %vm650 = vcmp.lt.s32.totalorder %v648, 10
        %vm651 = vcmp.lt.s32.totalorder %v649, 10
        %v652 = vsel %vm650, %v445, -1e+30
        %v653 = vsel %vm650, %v447, -1e+30
        %v654 = vsel %vm651, %v451, -1e+30
        %v655 = vsel %vm651, %v453, -1e+30
        %v656 = vmax.f32 %v652, %v654
        %v657 = vrot.slane %v656, 4
        %v658 = vmax.f32 %v656, %v657
        %v659 = vrot.slane %v658, 2
        %v660 = vmax.f32 %v658, %v659
        %v661 = vrot.slane %v660, 1
        %v662 = vmax.f32 %v660, %v661
        %v663 = vmax.f32 %v653, %v655
        %v664 = vrot.slane %v663, 4
        %v665 = vmax.f32 %v663, %v664
        %v666 = vrot.slane %v665, 2
        %v667 = vmax.f32 %v665, %v666
        %v668 = vrot.slane %v667, 1
        %v669 = vmax.f32 %v667, %v668
        %v670 = vsub.f32 %v652, %v662
        %v671 = vsub.f32 %v653, %v669
        %v672 = vsub.f32 %v654, %v662
        %v673 = vsub.f32 %v655, %v669
        %v674 = vmul.f32 %v670, 1.442695
        %v675 = vpow.pop %v674
        %v676 = vmul.f32 %v671, 1.442695
        %v677 = vpow.pop %v676
        %v678 = vmul.f32 %v672, 1.442695
        %v679 = vpow.pop %v678
        %v680 = vmul.f32 %v673, 1.442695
        %v681 = vpow.pop %v680
        %v682 = vadd.f32 %v675, %v679
        %v683 = vrot.slane %v682, 4
        %v684 = vadd.f32 %v682, %v683
        %v685 = vrot.slane %v684, 2
        %v686 = vadd.f32 %v684, %v685
        %v687 = vrot.slane %v686, 1
        %v688 = vadd.f32 %v686, %v687
        %v689 = vadd.f32 %v677, %v681
        %v690 = vrot.slane %v689, 4
        %v691 = vadd.f32 %v689, %v690
        %v692 = vrot.slane %v691, 2
        %v693 = vadd.f32 %v691, %v692
        %v694 = vrot.slane %v693, 1
        %v695 = vadd.f32 %v693, %v694
        %v696 = vlog2.pop %v688
        %v697 = vmul.f32 %v696, 0.6931472
        %v698 = vlog2.pop %v695
        %v699 = vmul.f32 %v698, 0.6931472
        %v700 = vadd.f32 %v662, %v697
        %v701 = vadd.f32 %v669, %v699
        %vm702 = vcmp.ge.s32.totalorder %v311, 8
        %vm703 = vcmp.lt.s32.totalorder %v311, 14
        %vm704 = vmand %vm702, %vm703
        %v705 = vsel %vm704, 8, %v311
        %vm706 = vcmp.ge.s32.totalorder %v311, 14
        %vm707 = vcmp.lt.s32.totalorder %v311, 20
        %vm708 = vmand %vm706, %vm707
        %v709 = vsel %vm708, 9, %v705
        %v710 = vlaneseq
        %v711 = vshrl.u32 %v710, 7
        %v712 = vsub.s32 0, %v711
        %v713 = vrot.slane %v709, %v712
        %v714 = vlaneseq
        %v715 = vshrl.u32 %v714, 7
        %v716 = vsub.s32 1, %v715
        %v717 = vrot.slane %v709, %v716
        %vm718 = vcmp.eq.s32.totalorder %v648, %v713
        %vm719 = vcmp.eq.s32.totalorder %v648, %v717
        %vm720 = vcmp.eq.s32.totalorder %v649, %v713
        %vm721 = vcmp.eq.s32.totalorder %v649, %v717
        %v722 = vsel %vm718, %v652, 0.0
        %v723 = vsel %vm719, %v653, 0.0
        %v724 = vsel %vm720, %v654, 0.0
        %v725 = vsel %vm721, %v655, 0.0
        %v726 = vadd.f32 %v722, %v724
        %v727 = vrot.slane %v726, 4
        %v728 = vadd.f32 %v726, %v727
        %v729 = vrot.slane %v728, 2
        %v730 = vadd.f32 %v728, %v729
        %v731 = vrot.slane %v730, 1
        %v732 = vadd.f32 %v730, %v731
        %v733 = vadd.f32 %v723, %v725
        %v734 = vrot.slane %v733, 4
        %v735 = vadd.f32 %v733, %v734
        %v736 = vrot.slane %v735, 2
        %v737 = vadd.f32 %v735, %v736
        %v738 = vrot.slane %v737, 1
        %v739 = vadd.f32 %v737, %v738
        %v740 = vsub.f32 %v732, %v700
        %v741 = vsub.f32 %v739, %v701
        %v742 = vld [vmem:[%s3] sm:$0xff]
        %743 = vmatprep.subr.mxu0 %v459
        %744 = vmatpush1.msra.mxu0 %v457
        %745 = vmatprep.subr.mxu0 %v465
        %746 = vmatpush1.msra.mxu0 %v463
        %747 = vmatprep.subr.mxu0 %v471
        %748 = vmatpush1.msra.mxu0 %v469
        %749 = vmatprep.subr.mxu0 %v477
        %750 = vmatpush1.msra.mxu0 %v475
        %751 = vmatprep.subr.mxu0 %v483
        %752 = vmatpush1.msra.mxu0 %v481
        %753 = vmatprep.subr.mxu0 %v489
        %754 = vmatpush1.msra.mxu0 %v487
        %755 = vmatprep.subr.mxu0 %v495
        %756 = vmatpush1.msra.mxu0 %v493
        %757 = vmatprep.subr.mxu0 %v501
        %758 = vmatpush1.msra.mxu0 %v499
        %759 = vmatprep.subr.mxu0 %v507
        %760 = vmatpush1.msra.mxu0 %v505
        %761 = vmatprep.subr.mxu0 %v513
        %762 = vmatpush1.msra.mxu0 %v511
        %763 = vmatprep.subr.mxu0 %v519
        %764 = vmatpush1.msra.mxu0 %v517
        %765 = vmatprep.subr.mxu0 %v525
        %766 = vmatpush1.msra.mxu0 %v523
        %767 = vmatprep.subr.mxu0 %v531
        %768 = vmatpush1.msra.mxu0 %v529
        %769 = vmatprep.subr.mxu0 %v537
        %770 = vmatpush1.msra.mxu0 %v535
        %771 = vmatprep.subr.mxu0 %v543
        %772 = vmatpush1.msra.mxu0 %v541
        %773 = vmatprep.subr.mxu0 %v549
        %774 = vmatpush1.msra.mxu0 %v547
        %775 = vmatprep.subr.mxu0 0.0
        %776 = vmatpush1.msra.mxu0 0.0
        %777 = vmatprep.subr.mxu0 0.0
        %778 = vmatpush1.msra.mxu0 0.0
        %779 = vmatprep.subr.mxu0 0.0
        %780 = vmatpush1.msra.mxu0 0.0
        %781 = vmatprep.subr.mxu0 0.0
        %782 = vmatpush1.msra.mxu0 0.0
        %783 = vmatprep.subr.mxu0 0.0
        %784 = vmatpush1.msra.mxu0 0.0
        %785 = vmatprep.subr.mxu0 0.0
        %786 = vmatpush1.msra.mxu0 0.0
        %787 = vmatprep.subr.mxu0 0.0
        %788 = vmatpush1.msra.mxu0 0.0
        %789 = vmatprep.subr.mxu0 0.0
        %790 = vmatpush1.msra.mxu0 0.0
        %791 = vmatprep.subr.mxu0 0.0
        %792 = vmatpush1.msra.mxu0 0.0
        %793 = vmatprep.subr.mxu0 0.0
        %794 = vmatpush1.msra.mxu0 0.0
        %795 = vmatprep.subr.mxu0 0.0
        %796 = vmatpush1.msra.mxu0 0.0
        %797 = vmatprep.subr.mxu0 0.0
        %798 = vmatpush1.msra.mxu0 0.0
        %799 = vmatprep.subr.mxu0 0.0
        %800 = vmatpush1.msra.mxu0 0.0
        %801 = vmatprep.subr.mxu0 0.0
        %802 = vmatpush1.msra.mxu0 0.0
        %803 = vmatprep.subr.mxu0 0.0
        %804 = vmatpush1.msra.mxu0 0.0
        %805 = vmatprep.subr.mxu0 0.0
        %806 = vmatpush1.msra.mxu0 0.0
        %807 = vmatprep.mubr.f32.mxu0 0.0
        %808 = vmatmul.mubr.f32.gmra.mrb[0].mxu0 %v742
        %v809 = vpop.f32.mrb[0].mxu0
        %v810 = vadd.f32 0.0, %v809
        %v811 = vpop.f32.mrb[0].mxu0
        %v812 = vadd.f32 0.0, %v811
        %813 = vdwg.mxu0
        %vm814 = vcmp.lt.s32.totalorder %v648, 6
        %v815 = vsel %vm814, %v810, -1e+30
        %v816 = vsel %vm814, %v812, -1e+30
        %v817 = vrot.slane %v815, 4
        %v818 = vmax.f32 %v815, %v817
        %v819 = vrot.slane %v818, 2
        %v820 = vmax.f32 %v818, %v819
        %v821 = vrot.slane %v820, 1
        %v822 = vmax.f32 %v820, %v821
        %v823 = vrot.slane %v816, 4
        %v824 = vmax.f32 %v816, %v823
        %v825 = vrot.slane %v824, 2
        %v826 = vmax.f32 %v824, %v825
        %v827 = vrot.slane %v826, 1
        %v828 = vmax.f32 %v826, %v827
        %v829 = vsub.f32 %v815, %v822
        %v830 = vsub.f32 %v816, %v828
        %v831 = vmul.f32 %v829, 1.442695
        %v832 = vpow.pop %v831
        %v833 = vmul.f32 %v830, 1.442695
        %v834 = vpow.pop %v833
        %v835 = vrot.slane %v832, 4
        %v836 = vadd.f32 %v832, %v835
        %v837 = vrot.slane %v836, 2
        %v838 = vadd.f32 %v836, %v837
        %v839 = vrot.slane %v838, 1
        %v840 = vadd.f32 %v838, %v839
        %v841 = vrot.slane %v834, 4
        %v842 = vadd.f32 %v834, %v841
        %v843 = vrot.slane %v842, 2
        %v844 = vadd.f32 %v842, %v843
        %v845 = vrot.slane %v844, 1
        %v846 = vadd.f32 %v844, %v845
        %v847 = vlog2.pop %v840
        %v848 = vmul.f32 %v847, 0.6931472
        %v849 = vlog2.pop %v846
        %v850 = vmul.f32 %v849, 0.6931472
        %v851 = vadd.f32 %v822, %v848
        %v852 = vadd.f32 %v828, %v850
        %v853 = vsub.s32 %v311, 8
        %vm854 = vcmp.gt.s32.totalorder %v853, 0
        %v855 = vsel %vm854, %v853, 0
        %vm856 = vcmp.lt.s32.totalorder %v855, 5
        %v857 = vsel %vm856, %v855, 5
        %v858 = vlaneseq
        %v859 = vshrl.u32 %v858, 7
        %v860 = vsub.s32 0, %v859
        %v861 = vrot.slane %v857, %v860
        %v862 = vlaneseq
        %v863 = vshrl.u32 %v862, 7
        %v864 = vsub.s32 1, %v863
        %v865 = vrot.slane %v857, %v864
        %vm866 = vcmp.eq.s32.totalorder %v648, %v861
        %vm867 = vcmp.eq.s32.totalorder %v648, %v865
        %v868 = vsel %vm866, %v815, 0.0
        %v869 = vsel %vm867, %v816, 0.0
        %v870 = vrot.slane %v868, 4
        %v871 = vadd.f32 %v868, %v870
        %v872 = vrot.slane %v871, 2
        %v873 = vadd.f32 %v871, %v872
        %v874 = vrot.slane %v873, 1
        %v875 = vadd.f32 %v873, %v874
        %v876 = vrot.slane %v869, 4
        %v877 = vadd.f32 %v869, %v876
        %v878 = vrot.slane %v877, 2
        %v879 = vadd.f32 %v877, %v878
        %v880 = vrot.slane %v879, 1
        %v881 = vadd.f32 %v879, %v880
        %v882 = vsub.f32 %v875, %v851
        %v883 = vsub.f32 %v881, %v852
        %v886 = vcombine.low %v882, %v883
        %v888 = vunpack.c.l.s4 1966171168
        %v889 = vunpack.c.0.s8 %v888
        %v890 = vlaneseq
        %v891 = vshrl.u32 %v890, 7
        %v892 = vsub.s32 %v889, %v891
        %v893 = vrot.slane %v886, %v892
        %v895 = vunpack.c.l.s4 1966171168
        %v896 = vunpack.c.0.s8 %v895
        %v897 = vlaneseq
        %v898 = vshrl.u32 %v897, 7
        %v899 = vsub.s32 %v896, %v898
        %v900 = vrot.slane %v893, %v899
        %v902 = vsel %vm704, %v900, 0.0
        %v904 = vlaneseq
        %v905 = vshrl.u32 %v904, 7
        %v906 = vsub.s32 0, %v905
        %v907 = vrot.slane %v902, %v906
        %v908 = vlaneseq
        %v909 = vshrl.u32 %v908, 7
        %v910 = vsub.s32 1, %v909
        %v911 = vrot.slane %v902, %v910
        %v914 = vadd.f32 %v740, %v907
        %v915 = vadd.f32 %v741, %v911
        %v916 = vld [vmem:[#allocation8] sm:$0xff]
        %917 = vmatprep.subr.mxu0 %v555
        %918 = vmatpush1.msra.mxu0 %v553
        %919 = vmatprep.subr.mxu0 %v561
        %920 = vmatpush1.msra.mxu0 %v559
        %921 = vmatprep.subr.mxu0 %v567
        %922 = vmatpush1.msra.mxu0 %v565
        %923 = vmatprep.subr.mxu0 %v573
        %924 = vmatpush1.msra.mxu0 %v571
        %925 = vmatprep.subr.mxu0 %v579
        %926 = vmatpush1.msra.mxu0 %v577
        %927 = vmatprep.subr.mxu0 %v585
        %928 = vmatpush1.msra.mxu0 %v583
        %929 = vmatprep.subr.mxu0 %v591
        %930 = vmatpush1.msra.mxu0 %v589
        %931 = vmatprep.subr.mxu0 %v597
        %932 = vmatpush1.msra.mxu0 %v595
        %933 = vmatprep.subr.mxu0 %v603
        %934 = vmatpush1.msra.mxu0 %v601
        %935 = vmatprep.subr.mxu0 %v609
        %936 = vmatpush1.msra.mxu0 %v607
        %937 = vmatprep.subr.mxu0 %v615
        %938 = vmatpush1.msra.mxu0 %v613
        %939 = vmatprep.subr.mxu0 %v621
        %940 = vmatpush1.msra.mxu0 %v619
        %941 = vmatprep.subr.mxu0 %v627
        %942 = vmatpush1.msra.mxu0 %v625
        %943 = vmatprep.subr.mxu0 %v633
        %944 = vmatpush1.msra.mxu0 %v631
        %945 = vmatprep.subr.mxu0 %v639
        %946 = vmatpush1.msra.mxu0 %v637
        %947 = vmatprep.subr.mxu0 %v645
        %948 = vmatpush1.msra.mxu0 %v643
        %949 = vmatprep.subr.mxu0 0.0
        %950 = vmatpush1.msra.mxu0 0.0
        %951 = vmatprep.subr.mxu0 0.0
        %952 = vmatpush1.msra.mxu0 0.0
        %953 = vmatprep.subr.mxu0 0.0
        %954 = vmatpush1.msra.mxu0 0.0
        %955 = vmatprep.subr.mxu0 0.0
        %956 = vmatpush1.msra.mxu0 0.0
        %957 = vmatprep.subr.mxu0 0.0
        %958 = vmatpush1.msra.mxu0 0.0
        %959 = vmatprep.subr.mxu0 0.0
        %960 = vmatpush1.msra.mxu0 0.0
        %961 = vmatprep.subr.mxu0 0.0
        %962 = vmatpush1.msra.mxu0 0.0
        %963 = vmatprep.subr.mxu0 0.0
        %964 = vmatpush1.msra.mxu0 0.0
        %965 = vmatprep.subr.mxu0 0.0
        %966 = vmatpush1.msra.mxu0 0.0
        %967 = vmatprep.subr.mxu0 0.0
        %968 = vmatpush1.msra.mxu0 0.0
        %969 = vmatprep.subr.mxu0 0.0
        %970 = vmatpush1.msra.mxu0 0.0
        %971 = vmatprep.subr.mxu0 0.0
        %972 = vmatpush1.msra.mxu0 0.0
        %973 = vmatprep.subr.mxu0 0.0
        %974 = vmatpush1.msra.mxu0 0.0
        %975 = vmatprep.subr.mxu0 0.0
        %976 = vmatpush1.msra.mxu0 0.0
        %977 = vmatprep.subr.mxu0 0.0
        %978 = vmatpush1.msra.mxu0 0.0
        %979 = vmatprep.subr.mxu0 0.0
        %980 = vmatpush1.msra.mxu0 0.0
        %981 = vmatprep.mubr.f32.mxu0 0.0
        %982 = vmatmul.mubr.f32.gmra.mrb[0].mxu0 %v916
        %v983 = vpop.f32.mrb[0].mxu0
        %v984 = vadd.f32 0.0, %v983
        %v985 = vpop.f32.mrb[0].mxu0
        %v986 = vadd.f32 0.0, %v985
        %987 = vdwg.mxu0
        %v988 = vsel %vm814, %v984, -1e+30
        %v989 = vsel %vm814, %v986, -1e+30
        %v990 = vrot.slane %v988, 4
        %v991 = vmax.f32 %v988, %v990
        %v992 = vrot.slane %v991, 2
        %v993 = vmax.f32 %v991, %v992
        %v994 = vrot.slane %v993, 1
        %v995 = vmax.f32 %v993, %v994
        %v996 = vrot.slane %v989, 4
        %v997 = vmax.f32 %v989, %v996
        %v998 = vrot.slane %v997, 2
        %v999 = vmax.f32 %v997, %v998
        %v1000 = vrot.slane %v999, 1
        %v1001 = vmax.f32 %v999, %v1000
        %v1002 = vsub.f32 %v988, %v995
        %v1003 = vsub.f32 %v989, %v1001
        %v1004 = vmul.f32 %v1002, 1.442695
        %v1005 = vpow.pop %v1004
        %v1006 = vmul.f32 %v1003, 1.442695
        %v1007 = vpow.pop %v1006
        %v1008 = vrot.slane %v1005, 4
        %v1009 = vadd.f32 %v1005, %v1008
        %v1010 = vrot.slane %v1009, 2
        %v1011 = vadd.f32 %v1009, %v1010
        %v1012 = vrot.slane %v1011, 1
        %v1013 = vadd.f32 %v1011, %v1012
        %v1014 = vrot.slane %v1007, 4
        %v1015 = vadd.f32 %v1007, %v1014
        %v1016 = vrot.slane %v1015, 2
        %v1017 = vadd.f32 %v1015, %v1016
        %v1018 = vrot.slane %v1017, 1
        %v1019 = vadd.f32 %v1017, %v1018
        %v1020 = vlog2.pop %v1013
        %v1021 = vmul.f32 %v1020, 0.6931472
        %v1022 = vlog2.pop %v1019
        %v1023 = vmul.f32 %v1022, 0.6931472
        %v1024 = vadd.f32 %v995, %v1021
        %v1025 = vadd.f32 %v1001, %v1023
        %v1026 = vsub.s32 %v311, 14
        %vm1027 = vcmp.gt.s32.totalorder %v1026, 0
        %v1028 = vsel %vm1027, %v1026, 0
        %vm1029 = vcmp.lt.s32.totalorder %v1028, 5
        %v1030 = vsel %vm1029, %v1028, 5
        %v1031 = vlaneseq
        %v1032 = vshrl.u32 %v1031, 7
        %v1033 = vsub.s32 0, %v1032
        %v1034 = vrot.slane %v1030, %v1033
        %v1035 = vlaneseq
        %v1036 = vshrl.u32 %v1035, 7
        %v1037 = vsub.s32 1, %v1036
        %v1038 = vrot.slane %v1030, %v1037
        %vm1039 = vcmp.eq.s32.totalorder %v648, %v1034
        %vm1040 = vcmp.eq.s32.totalorder %v648, %v1038
        %v1041 = vsel %vm1039, %v988, 0.0
        %v1042 = vsel %vm1040, %v989, 0.0
        %v1043 = vrot.slane %v1041, 4
        %v1044 = vadd.f32 %v1041, %v1043
        %v1045 = vrot.slane %v1044, 2
        %v1046 = vadd.f32 %v1044, %v1045
        %v1047 = vrot.slane %v1046, 1
        %v1048 = vadd.f32 %v1046, %v1047
        %v1049 = vrot.slane %v1042, 4
        %v1050 = vadd.f32 %v1042, %v1049
        %v1051 = vrot.slane %v1050, 2
        %v1052 = vadd.f32 %v1050, %v1051
        %v1053 = vrot.slane %v1052, 1
        %v1054 = vadd.f32 %v1052, %v1053
        %v1055 = vsub.f32 %v1048, %v1024
        %v1056 = vsub.f32 %v1054, %v1025
        %v1059 = vcombine.low %v1055, %v1056
        %v1061 = vunpack.c.l.s4 1966171168
        %v1062 = vunpack.c.0.s8 %v1061
        %v1063 = vlaneseq
        %v1064 = vshrl.u32 %v1063, 7
        %v1065 = vsub.s32 %v1062, %v1064
        %v1066 = vrot.slane %v1059, %v1065
        %v1068 = vunpack.c.l.s4 1966171168
        %v1069 = vunpack.c.0.s8 %v1068
        %v1070 = vlaneseq
        %v1071 = vshrl.u32 %v1070, 7
        %v1072 = vsub.s32 %v1069, %v1071
        %v1073 = vrot.slane %v1066, %v1072
        %v1075 = vsel %vm708, %v1073, 0.0
        %v1077 = vlaneseq
        %v1078 = vshrl.u32 %v1077, 7
        %v1079 = vsub.s32 0, %v1078
        %v1080 = vrot.slane %v1075, %v1079
        %v1081 = vlaneseq
        %v1082 = vshrl.u32 %v1081, 7
        %v1083 = vsub.s32 1, %v1082
        %v1084 = vrot.slane %v1075, %v1083
        %v1087 = vadd.f32 %v914, %v1080
        %v1088 = vadd.f32 %v915, %v1084
        %v1091 = vcombine.low %v1087, %v1088
        %v1093 = vunpack.c.l.s4 1966171168
        %v1094 = vunpack.c.0.s8 %v1093
        %v1095 = vlaneseq
        %v1096 = vshrl.u32 %v1095, 7
        %v1097 = vsub.s32 %v1094, %v1096
        %v1098 = vrot.slane %v1091, %v1097
        %v1100 = vunpack.c.l.s4 1966171168
        %v1101 = vunpack.c.0.s8 %v1100
        %v1102 = vlaneseq
        %v1103 = vshrl.u32 %v1102, 7
        %v1104 = vsub.s32 %v1101, %v1103
        %v1105 = vrot.slane %v1098, %v1104
        %v1107 = vlaneseq
        %vm1108 = vcmp.ge.s32.totalorder %v1107, 0
        %vm1109 = vcmp.lt.s32.totalorder %v1107, 256
        %vm1110 = vmand %vm1108, %vm1109
        %1111 = vst.msk [vmem:[%s307] sm:$0x3] %vm1110, %v1105
        %s1112 = sand.u32 %s149, 1
        %s1113 = scalar_lea.sflag [#allocation4], %s1112
        %s1114 = sand.u32 %s149, 1
        %s1115 = smul.addr %s1114, 2
        %s1116 = scalar_lea.vmem [#allocation10], %s1115
        // Predicated region
        $region57: #{tpu_custom_call.1} parent=39 // pred_check
          %p1117 = pneg %p159
        $region58: #{tpu_custom_call.1} parent=39 // pred_check_branch
          %1119 = sbr.rel (%p1117) target = $region60
        $region59: #{tpu_custom_call.1} parent=39 // pred_region
          %s1120 = smul.u32 2, %s26
          %s1122 = ssub.s32 32, 32
          %1123 = vsyncadd %s1113, %s1122
          %s1124 = smul.addr %s1120, 16
          %s1125 = scalar_lea.hbm %s5, %s1124
          %s1127 = sshll.u32 %s1116, 4
          %s1128 = int_to_ptr.vmem [resolvable:$true] %s1127
          %1130 = dma.vmem_to_hbm [thread:$0]  %s1128, 32, %s1125, %s1113
        $region60: #{tpu_custom_call.1} parent=39 // pred_fallthru
          _
      $region40: #{tpu_custom_call.1} parent=5 // pred_fallthru
        _
      %p1131 = scmp.le.s32.totalorder 2, %s21
      // Predicated region
      $region61: #{tpu_custom_call.1} parent=5 // pred_check
        %p1132 = pneg %p1131
      $region62: #{tpu_custom_call.1} parent=5 // pred_check_branch
        %1134 = sbr.rel (%p1132) target = $region64
      $region63: #{tpu_custom_call.1} parent=5 // pred_region
        %s1135 = ssub.s32 %s21, 2
        // Predicated region
        $region65: #{tpu_custom_call.1} parent=63 // pred_check
          %p1136 = pneg %p165
        $region66: #{tpu_custom_call.1} parent=63 // pred_check_branch
          %1138 = sbr.rel (%p1136) target = $region68
        $region67: #{tpu_custom_call.1} parent=63 // pred_region
          %s1139 = sand.u32 %s150, 1
          %s1140 = scalar_lea.sflag [#allocation4], %s1139
          %s1141 = sand.u32 %s150, 1
          %s1142 = smul.addr %s1141, 2
          %s1143 = scalar_lea.vmem [#allocation10], %s1142
          %1144 = dma.done %s1140, 32
        $region68: #{tpu_custom_call.1} parent=63 // pred_fallthru
          _
      $region64: #{tpu_custom_call.1} parent=5 // pred_fallthru
        _
    $region6: #{tpu_custom_call.1} parent=1 // loop_footer
      %s25 = sadd.s32 1, %s21
    $region7: #{tpu_custom_call.1} parent=1 // loop_footer_branch
      %20 = sbr.rel target = $region3
    $region8: #{tpu_custom_call.1} parent=1 // loop_exit
      _
    %1145 = vsyncpa [#allocation3], 1
    %s1146 = scalar_lea.sflag [#allocation3], 1
    %1147 = vsyncpa %s1146, 1
    %1148 = vsyncpa [#allocation6], 1
    %s1149 = scalar_lea.sflag [#allocation6], 1
    %1150 = vsyncpa %s1149, 1
    %1151 = vsyncpa [#allocation9], 1
    %1152 = vsyncpa [#allocation4], 1
    %s1153 = scalar_lea.sflag [#allocation4], 1
    %1154 = vsyncpa %s1153, 1

// kernel: tpu_custom_call.1
$region0: #{tpu_custom_call.1}
  #allocation0 [shape = 'u32[]', space=smem, size = 0x4, offset = 0x4, fixed_abs, tag = 'smem constant byte address 0x4 - core index']
  #allocation1 [shape = 'u32[144,128]{1,0:T(1,128)}', space=vmem, size = 0x12000, scoped, tag = 'internal scratch']
  %s0 = inlined_call_operand.hbm [shape: f32[512,128], index: 0, kind: input, shape index: {}]
  %s1 = inlined_call_operand.hbm [shape: s32[1,512], index: 1, kind: input, shape index: {}]
  %s2 = inlined_call_operand.hbm [shape: f32[272,128], index: 2, kind: input, shape index: {}]
  %s3 = inlined_call_operand.vmem [shape: f32[8,128], index: 3, kind: input, shape index: {}]
  %s4 = inlined_call_operand.hbm [shape: f32[8,128], index: 4, kind: input, shape index: {}]
  %s5 = inlined_call_operand.hbm [shape: f32[1,512], index: 5, kind: output, shape index: {}]
  %s6 = sld [smem:[#allocation0]]
  $region69: #{tpu_custom_call.1} parent=0
    _
  %s8 = ssub.s32 1, %s6
  %s9 = scalar_select 0, %s8, %s6
  $region1: #{tpu_custom_call.1} parent=0
    #allocation2 [shape = 'u8[262144]{0}', space=vmem, size = 0x40000, scoped, tag = 'input window, operand 0']
    #allocation3 [shape = 's32[2]{0}', space=sflag, size = 0x8, scoped, tag = 'scoped memory for tpu_custom_call.1']
    #allocation4 [shape = 's32[2]{0}', space=sflag, size = 0x8, scoped, tag = 'scoped memory for tpu_custom_call.1']
    #allocation5 [shape = 'u8[2048]{0}', space=vmem, size = 0x800, scoped, tag = 'input window, operand 1']
    #allocation6 [shape = 's32[2]{0}', space=sflag, size = 0x8, scoped, tag = 'scoped memory for tpu_custom_call.1']
    #allocation7 [shape = 'u8[139264]{0}', space=vmem, size = 0x22000, scoped, tag = 'input window, operand 2, single buffered']
    #allocation8 [shape = 'u8[4096]{0}', space=vmem, size = 0x1000, scoped, tag = 'input window, operand 4, single buffered']
    #allocation9 [shape = 's32[1]{0}', space=sflag, size = 0x4, scoped, tag = 'scoped memory for tpu_custom_call.1']
    #allocation10 [shape = 'u8[2048]{0}', space=vmem, size = 0x800, scoped, tag = 'output window, operand 0']
    %10 = vsyncpa [#allocation3], 0
    %s11 = scalar_lea.sflag [#allocation3], 1
    %12 = vsyncpa %s11, 0
    %13 = vsyncpa [#allocation6], 0
    %s14 = scalar_lea.sflag [#allocation6], 1
    %15 = vsyncpa %s14, 0
    %16 = vsyncpa [#allocation9], 0
    %17 = vsyncpa [#allocation4], 0
    %s18 = scalar_lea.sflag [#allocation4], 1
    %19 = vsyncpa %s18, 0
    loop: start=0, step=1, limit=4
    $region2: #{tpu_custom_call.1} parent=1 // loop_pre_header
      _
    $region3: #{tpu_custom_call.1} parent=1 // loop_header
      %s21 = sphi 0, %s25
      %p22 = scmp.ge.s32.totalorder %s21, 4
      %s31 = sphi 0, %s33
      %s34 = sphi 0, %s31
      %s35 = sphi 0, %s34
      %s51 = sphi 0, %s35
      %s57 = sphi 0, %s59
      %s60 = sphi 0, %s57
      %s61 = sphi 0, %s60
      %s77 = sphi 0, %s61
      %s81 = sphi 0, %s81
      %s83 = sphi 0, %s81
      %s84 = sphi 0, %s83
      %s98 = sphi 0, %s84
      %s102 = sphi 0, %s102
      %s104 = sphi 0, %s102
      %s105 = sphi 0, %s104
      %s119 = sphi 0, %s105
      %s123 = sphi 0, %s123
      %s125 = sphi 0, %s123
      %s126 = sphi 0, %s125
      %s140 = sphi 0, %s126
      %s146 = sphi 0, %s148
      %s149 = sphi 0, %s146
      %s150 = sphi 0, %s149
      %s166 = sphi 0, %s150
    $region4: #{tpu_custom_call.1} parent=1 // loop_header_branch
      %24 = sbr.rel (%p22) target = $region8
    $region5: #{tpu_custom_call.1} parent=1 // loop_body
      %s26 = ssub.s32 %s21, 1
      %s27 = ssub.s32 %s21, 2
      %s28 = sadd.s32 %s21, 1
      %s29 = ssub.s32 %s21, %s28
      %p30 = scmp.eq.s32.totalorder %s29, 0
      %s32 = sadd.s32 %s31, 1
      %s33 = scalar_select %p30, %s31, %s32
      %p36 = pneg %p30
      %p37 = scmp.eq.s32.totalorder %s21, 1
      %p38 = por %p36, %p37
      %p39 = scmp.ne.s32.totalorder %s31, %s34
      %p40 = scmp.eq.s32.totalorder %s21, 0
      %p41 = por %p39, %p40
      %p42 = scmp.ne.s32.totalorder %s31, %s34
      %p43 = scmp.eq.s32.totalorder %s26, 1
      %p44 = por %p42, %p43
      %p45 = scmp.ne.s32.totalorder %s34, %s35
      %p46 = scmp.eq.s32.totalorder %s26, 0
      %p47 = por %p45, %p46
      %p48 = scmp.ne.s32.totalorder %s34, %s35
      %p49 = scmp.eq.s32.totalorder %s27, 1
      %p50 = por %p48, %p49
      %p52 = scmp.ne.s32.totalorder %s35, %s51
      %p53 = scmp.eq.s32.totalorder %s27, 0
      %p54 = por %p52, %p53
      %s55 = ssub.s32 %s21, %s28
      %p56 = scmp.eq.s32.totalorder %s55, 0
      %s58 = sadd.s32 %s57, 1
      %s59 = scalar_select %p56, %s57, %s58
      %p62 = pneg %p56
      %p63 = scmp.eq.s32.totalorder %s21, 1
      %p64 = por %p62, %p63
      %p65 = scmp.ne.s32.totalorder %s57, %s60
      %p66 = scmp.eq.s32.totalorder %s21, 0
      %p67 = por %p65, %p66
      %p68 = scmp.ne.s32.totalorder %s57, %s60
      %p69 = scmp.eq.s32.totalorder %s26, 1
      %p70 = por %p68, %p69
      %p71 = scmp.ne.s32.totalorder %s60, %s61
      %p72 = scmp.eq.s32.totalorder %s26, 0
      %p73 = por %p71, %p72
      %p74 = scmp.ne.s32.totalorder %s60, %s61
      %p75 = scmp.eq.s32.totalorder %s27, 1
      %p76 = por %p74, %p75
      %p78 = scmp.ne.s32.totalorder %s61, %s77
      %p79 = scmp.eq.s32.totalorder %s27, 0
      %p80 = por %p78, %p79
      %s82 = sadd.s32 %s81, 1
      %p85 = scmp.eq.s32.totalorder %s21, 1
      %p86 = scmp.ne.s32.totalorder %s81, %s83
      %p87 = scmp.eq.s32.totalorder %s21, 0
      %p88 = por %p86, %p87
      %p89 = scmp.ne.s32.totalorder %s81, %s83
      %p90 = scmp.eq.s32.totalorder %s26, 1
      %p91 = por %p89, %p90
      %p92 = scmp.ne.s32.totalorder %s83, %s84
      %p93 = scmp.eq.s32.totalorder %s26, 0
      %p94 = por %p92, %p93
      %p95 = scmp.ne.s32.totalorder %s83, %s84
      %p96 = scmp.eq.s32.totalorder %s27, 1
      %p97 = por %p95, %p96
      %p99 = scmp.ne.s32.totalorder %s84, %s98
      %p100 = scmp.eq.s32.totalorder %s27, 0
      %p101 = por %p99, %p100
      %s103 = sadd.s32 %s102, 1
      %p106 = scmp.eq.s32.totalorder %s21, 1
      %p107 = scmp.ne.s32.totalorder %s102, %s104
      %p108 = scmp.eq.s32.totalorder %s21, 0
      %p109 = por %p107, %p108
      %p110 = scmp.ne.s32.totalorder %s102, %s104
      %p111 = scmp.eq.s32.totalorder %s26, 1
      %p112 = por %p110, %p111
      %p113 = scmp.ne.s32.totalorder %s104, %s105
      %p114 = scmp.eq.s32.totalorder %s26, 0
      %p115 = por %p113, %p114
      %p116 = scmp.ne.s32.totalorder %s104, %s105
      %p117 = scmp.eq.s32.totalorder %s27, 1
      %p118 = por %p116, %p117
      %p120 = scmp.ne.s32.totalorder %s105, %s119
      %p121 = scmp.eq.s32.totalorder %s27, 0
      %p122 = por %p120, %p121
      %s124 = sadd.s32 %s123, 1
      %p127 = scmp.eq.s32.totalorder %s21, 1
      %p128 = scmp.ne.s32.totalorder %s123, %s125
      %p129 = scmp.eq.s32.totalorder %s21, 0
      %p130 = por %p128, %p129
      %p131 = scmp.ne.s32.totalorder %s123, %s125
      %p132 = scmp.eq.s32.totalorder %s26, 1
      %p133 = por %p131, %p132
      %p134 = scmp.ne.s32.totalorder %s125, %s126
      %p135 = scmp.eq.s32.totalorder %s26, 0
      %p136 = por %p134, %p135
      %p137 = scmp.ne.s32.totalorder %s125, %s126
      %p138 = scmp.eq.s32.totalorder %s27, 1
      %p139 = por %p137, %p138
      %p141 = scmp.ne.s32.totalorder %s126, %s140
      %p142 = scmp.eq.s32.totalorder %s27, 0
      %p143 = por %p141, %p142
      %s144 = ssub.s32 %s21, %s28
      %p145 = scmp.eq.s32.totalorder %s144, 0
      %s147 = sadd.s32 %s146, 1
      %s148 = scalar_select %p145, %s146, %s147
      %p151 = pneg %p145
      %p152 = scmp.eq.s32.totalorder %s21, 1
      %p153 = por %p151, %p152
      %p154 = scmp.ne.s32.totalorder %s146, %s149
      %p155 = scmp.eq.s32.totalorder %s21, 0
      %p156 = por %p154, %p155
      %p157 = scmp.ne.s32.totalorder %s146, %s149
      %p158 = scmp.eq.s32.totalorder %s26, 1
      %p159 = por %p157, %p158
      %p160 = scmp.ne.s32.totalorder %s149, %s150
      %p161 = scmp.eq.s32.totalorder %s26, 0
      %p162 = por %p160, %p161
      %p163 = scmp.ne.s32.totalorder %s149, %s150
      %p164 = scmp.eq.s32.totalorder %s27, 1
      %p165 = por %p163, %p164
      %p167 = scmp.ne.s32.totalorder %s150, %s166
      %p168 = scmp.eq.s32.totalorder %s27, 0
      %p169 = por %p167, %p168
      %p170 = scmp.le.s32.totalorder 1, %s21
      %p171 = scmp.lt.s32.totalorder %s21, 3
      %p172 = pnand %p170, %p171
      %p173 = pneg %p172
      // Predicated region
      $region9: #{tpu_custom_call.1} parent=5 // pred_check
        _
      $region10: #{tpu_custom_call.1} parent=5 // pred_check_branch
        %175 = sbr.rel (%p172) target = $region12
      $region11: #{tpu_custom_call.1} parent=5 // pred_region
        %s176 = ssub.s32 %s21, 1
        // Predicated region
        $region13: #{tpu_custom_call.1} parent=11 // pred_check
          %p177 = pneg %p94
        $region14: #{tpu_custom_call.1} parent=11 // pred_check_branch
          %179 = sbr.rel (%p177) target = $region16
        $region15: #{tpu_custom_call.1} parent=11 // pred_region
          %s181 = ssub.s32 4352, 4352
          %182 = vsyncadd [#allocation6], %s181
          %s183 = sshll.u32 [#allocation7], 4
          %s184 = int_to_ptr.vmem [resolvable:$true] %s183
          %189 = dma.hbm_to_vmem [thread:$0]  %s2, 4352, %s184, [#allocation6], 128, 128, 8
        $region16: #{tpu_custom_call.1} parent=11 // pred_fallthru
          _
        // Predicated region
        $region17: #{tpu_custom_call.1} parent=11 // pred_check
          %p190 = pneg %p115
        $region18: #{tpu_custom_call.1} parent=11 // pred_check_branch
          %192 = sbr.rel (%p190) target = $region20
        $region19: #{tpu_custom_call.1} parent=11 // pred_region
          _
        $region20: #{tpu_custom_call.1} parent=11 // pred_fallthru
          _
        // Predicated region
        $region21: #{tpu_custom_call.1} parent=11 // pred_check
          %p193 = pneg %p136
        $region22: #{tpu_custom_call.1} parent=11 // pred_check_branch
          %195 = sbr.rel (%p193) target = $region24
        $region23: #{tpu_custom_call.1} parent=11 // pred_region
          %s197 = ssub.s32 128, 128
          %198 = vsyncadd [#allocation9], %s197
          %s200 = sshll.u32 [#allocation8], 4
          %s201 = int_to_ptr.vmem [resolvable:$true] %s200
          %203 = dma.hbm_to_vmem [thread:$0]  %s4, 128, %s201, [#allocation9]
        $region24: #{tpu_custom_call.1} parent=11 // pred_fallthru
          _
      $region12: #{tpu_custom_call.1} parent=5 // pred_fallthru
        _
      %p204 = scmp.lt.s32.totalorder %s21, 2
      // Predicated region
      $region25: #{tpu_custom_call.1} parent=5 // pred_check
        %p205 = pneg %p204
      $region26: #{tpu_custom_call.1} parent=5 // pred_check_branch
        %207 = sbr.rel (%p205) target = $region28
      $region27: #{tpu_custom_call.1} parent=5 // pred_region
        // Predicated region
        $region29: #{tpu_custom_call.1} parent=27 // pred_check
          %p208 = pneg %p41
        $region30: #{tpu_custom_call.1} parent=27 // pred_check_branch
          %210 = sbr.rel (%p208) target = $region32
        $region31: #{tpu_custom_call.1} parent=27 // pred_region
          %s211 = sand.u32 %s31, 1
          %s212 = scalar_lea.sflag [#allocation3], %s211
          %s213 = sand.u32 %s31, 1
          %s214 = smul.addr %s213, 256
          %s215 = scalar_lea.vmem [#allocation2], %s214
          %s216 = smul.u32 32, %s21
          %s218 = ssub.s32 4096, 4096
          %219 = vsyncadd %s212, %s218
          %s220 = smul.addr %s216, 128
          %s221 = scalar_lea.hbm %s0, %s220
          %s222 = sshll.u32 %s215, 4
          %s223 = int_to_ptr.vmem [resolvable:$true] %s222
          %228 = dma.hbm_to_vmem [thread:$0]  %s221, 4096, %s223, %s212, 128, 128, 8
        $region32: #{tpu_custom_call.1} parent=27 // pred_fallthru
          _
        // Predicated region
        $region33: #{tpu_custom_call.1} parent=27 // pred_check
          %p229 = pneg %p67
        $region34: #{tpu_custom_call.1} parent=27 // pred_check_branch
          %231 = sbr.rel (%p229) target = $region36
        $region35: #{tpu_custom_call.1} parent=27 // pred_region
          %s232 = sand.u32 %s21, 1
          %s233 = scalar_lea.sflag [#allocation6], %s232
          %s234 = sand.u32 %s57, 1
          %s235 = smul.addr %s234, 2
          %s236 = scalar_lea.vmem [#allocation5], %s235
          %s237 = smul.u32 2, %s21
          %s239 = ssub.s32 32, 32
          %240 = vsyncadd %s233, %s239
          %s241 = smul.addr %s237, 16
          %s242 = scalar_lea.hbm %s1, %s241
          %s244 = sshll.u32 %s236, 4
          %s245 = int_to_ptr.vmem [resolvable:$true] %s244
          %247 = dma.hbm_to_vmem [thread:$0]  %s242, 32, %s245, %s233
        $region36: #{tpu_custom_call.1} parent=27 // pred_fallthru
          _
      $region28: #{tpu_custom_call.1} parent=5 // pred_fallthru
        _
      %p248 = scmp.le.s32.totalorder 1, %s21
      %p249 = scmp.lt.s32.totalorder %s21, 3
      %p250 = pnand %p248, %p249
      %p251 = pneg %p250
      // Predicated region
      $region37: #{tpu_custom_call.1} parent=5 // pred_check
        _
      $region38: #{tpu_custom_call.1} parent=5 // pred_check_branch
        %253 = sbr.rel (%p250) target = $region40
      $region39: #{tpu_custom_call.1} parent=5 // pred_region
        %s254 = ssub.s32 %s21, 1
        %s255 = sand.u32 %s34, 1
        %s256 = scalar_lea.sflag [#allocation3], %s255
        %s257 = sand.u32 %s34, 1
        %s258 = smul.addr %s257, 256
        %s259 = scalar_lea.vmem [#allocation2], %s258
        // Predicated region
        $region41: #{tpu_custom_call.1} parent=39 // pred_check
          %p260 = pneg %p47
        $region42: #{tpu_custom_call.1} parent=39 // pred_check_branch
          %262 = sbr.rel (%p260) target = $region44
        $region43: #{tpu_custom_call.1} parent=39 // pred_region
          %263 = dma.done %s256, 4096
        $region44: #{tpu_custom_call.1} parent=39 // pred_fallthru
          _
        %s264 = sand.u32 %s26, 1
        %s265 = scalar_lea.sflag [#allocation6], %s264
        %s266 = sand.u32 %s60, 1
        %s267 = smul.addr %s266, 2
        %s268 = scalar_lea.vmem [#allocation5], %s267
        // Predicated region
        $region45: #{tpu_custom_call.1} parent=39 // pred_check
          %p269 = pneg %p73
        $region46: #{tpu_custom_call.1} parent=39 // pred_check_branch
          %271 = sbr.rel (%p269) target = $region48
        $region47: #{tpu_custom_call.1} parent=39 // pred_region
          %272 = dma.done %s265, 32
        $region48: #{tpu_custom_call.1} parent=39 // pred_fallthru
          _
        // Predicated region
        $region49: #{tpu_custom_call.1} parent=39 // pred_check
          %p273 = pneg %p94
        $region50: #{tpu_custom_call.1} parent=39 // pred_check_branch
          %275 = sbr.rel (%p273) target = $region52
        $region51: #{tpu_custom_call.1} parent=39 // pred_region
          %276 = dma.done [#allocation6], 4352
        $region52: #{tpu_custom_call.1} parent=39 // pred_fallthru
          _
        // Predicated region
        $region53: #{tpu_custom_call.1} parent=39 // pred_check
          %p277 = pneg %p136
        $region54: #{tpu_custom_call.1} parent=39 // pred_check_branch
          %279 = sbr.rel (%p277) target = $region56
        $region55: #{tpu_custom_call.1} parent=39 // pred_region
          %280 = dma.done [#allocation9], 128
        $region56: #{tpu_custom_call.1} parent=39 // pred_fallthru
          _
        %s281 = sand.u32 %s34, 1
        %s282 = scalar_lea.sflag [#allocation3], %s281
        %s283 = sand.u32 %s34, 1
        %s284 = smul.addr %s283, 256
        %s285 = scalar_lea.vmem [#allocation2], %s284
        %p286 = pneg %p47
        %p287 = pneg %p44
        %s288 = sand.u32 %s26, 1
        %s289 = scalar_lea.sflag [#allocation6], %s288
        %s290 = sand.u32 %s60, 1
        %s291 = smul.addr %s290, 2
        %s292 = scalar_lea.vmem [#allocation5], %s291
        %p293 = pneg %p73
        %p294 = pneg %p70
        %p295 = pneg %p94
        %p296 = pneg %p91
        %p297 = pneg %p115
        %p298 = pneg %p112
        %p299 = pneg %p136
        %p300 = pneg %p133
        %p301 = pneg %p162
        %p302 = pneg %p159
        %s303 = sand.u32 %s149, 1
        %s304 = scalar_lea.sflag [#allocation4], %s303
        %s305 = sand.u32 %s149, 1
        %s306 = smul.addr %s305, 2
        %s307 = scalar_lea.vmem [#allocation10], %s306
        %s308 = smul.u32 32, %s26
        %s309 = smul.u32 2, %s26
        %s310 = smul.u32 2, %s26
        %v311 = vld [vmem:[%s268] sm:$0x3]
        %v312 = vld [vmem:[#allocation7] sm:$0xff]
        %v313 = vld [vmem:[#allocation7 + $0x8] sm:$0xff]
        %v314 = vld [vmem:[#allocation7 + $0x10] sm:$0xff]
        %v315 = vld [vmem:[#allocation7 + $0x18] sm:$0xff]
        %v316 = vld [vmem:[#allocation7 + $0x20] sm:$0xff]
        %v317 = vld [vmem:[#allocation7 + $0x28] sm:$0xff]
        %v318 = vld [vmem:[#allocation7 + $0x30] sm:$0xff]
        %v319 = vld [vmem:[#allocation7 + $0x38] sm:$0xff]
        %v320 = vld [vmem:[#allocation7 + $0x40] sm:$0xff]
        %v321 = vld [vmem:[#allocation7 + $0x48] sm:$0xff]
        %v322 = vld [vmem:[#allocation7 + $0x50] sm:$0xff]
        %v323 = vld [vmem:[#allocation7 + $0x58] sm:$0xff]
        %v324 = vld [vmem:[#allocation7 + $0x60] sm:$0xff]
        %v325 = vld [vmem:[#allocation7 + $0x68] sm:$0xff]
        %v326 = vld [vmem:[#allocation7 + $0x70] sm:$0xff]
        %v327 = vld [vmem:[#allocation7 + $0x78] sm:$0xff]
        %v328 = vld [vmem:[#allocation7 + $0x80] sm:$0xff]
        %v329 = vld [vmem:[#allocation7 + $0x88] sm:$0xff]
        %v330 = vld [vmem:[#allocation7 + $0x90] sm:$0xff]
        %v331 = vld [vmem:[#allocation7 + $0x98] sm:$0xff]
        %v332 = vld [vmem:[#allocation7 + $0xa0] sm:$0xff]
        %v333 = vld [vmem:[#allocation7 + $0xa8] sm:$0xff]
        %v334 = vld [vmem:[#allocation7 + $0xb0] sm:$0xff]
        %v335 = vld [vmem:[#allocation7 + $0xb8] sm:$0xff]
        %v336 = vld [vmem:[#allocation7 + $0xc0] sm:$0xff]
        %v337 = vld [vmem:[#allocation7 + $0xc8] sm:$0xff]
        %v338 = vld [vmem:[#allocation7 + $0xd0] sm:$0xff]
        %v339 = vld [vmem:[#allocation7 + $0xd8] sm:$0xff]
        %v340 = vld [vmem:[#allocation7 + $0xe0] sm:$0xff]
        %v341 = vld [vmem:[#allocation7 + $0xe8] sm:$0xff]
        %v342 = vld [vmem:[#allocation7 + $0xf0] sm:$0xff]
        %v343 = vld [vmem:[#allocation7 + $0xf8] sm:$0xff]
        %v344 = vld [vmem:[#allocation7 + $0x100] sm:$0xff]
        %v345 = vld [vmem:[#allocation7 + $0x108] sm:$0xff]
        %v346 = vld [vmem:[%s259] sm:$0xff]
        %v347 = vld [vmem:[%s259 + $0x8] sm:$0xff]
        %v348 = vld [vmem:[%s259 + $0x10] sm:$0xff]
        %v349 = vld [vmem:[%s259 + $0x18] sm:$0xff]
        %v350 = vld [vmem:[%s259 + $0x20] sm:$0xff]
        %v351 = vld [vmem:[%s259 + $0x28] sm:$0xff]
        %v352 = vld [vmem:[%s259 + $0x30] sm:$0xff]
        %v353 = vld [vmem:[%s259 + $0x38] sm:$0xff]
        %v354 = vld [vmem:[%s259 + $0x40] sm:$0xff]
        %v355 = vld [vmem:[%s259 + $0x48] sm:$0xff]
        %v356 = vld [vmem:[%s259 + $0x50] sm:$0xff]
        %v357 = vld [vmem:[%s259 + $0x58] sm:$0xff]
        %v358 = vld [vmem:[%s259 + $0x60] sm:$0xff]
        %v359 = vld [vmem:[%s259 + $0x68] sm:$0xff]
        %v360 = vld [vmem:[%s259 + $0x70] sm:$0xff]
        %v361 = vld [vmem:[%s259 + $0x78] sm:$0xff]
        %v362 = vld [vmem:[%s259 + $0x80] sm:$0xff]
        %v363 = vld [vmem:[%s259 + $0x88] sm:$0xff]
        %v364 = vld [vmem:[%s259 + $0x90] sm:$0xff]
        %v365 = vld [vmem:[%s259 + $0x98] sm:$0xff]
        %v366 = vld [vmem:[%s259 + $0xa0] sm:$0xff]
        %v367 = vld [vmem:[%s259 + $0xa8] sm:$0xff]
        %v368 = vld [vmem:[%s259 + $0xb0] sm:$0xff]
        %v369 = vld [vmem:[%s259 + $0xb8] sm:$0xff]
        %v370 = vld [vmem:[%s259 + $0xc0] sm:$0xff]
        %v371 = vld [vmem:[%s259 + $0xc8] sm:$0xff]
        %v372 = vld [vmem:[%s259 + $0xd0] sm:$0xff]
        %v373 = vld [vmem:[%s259 + $0xd8] sm:$0xff]
        %v374 = vld [vmem:[%s259 + $0xe0] sm:$0xff]
        %v375 = vld [vmem:[%s259 + $0xe8] sm:$0xff]
        %v376 = vld [vmem:[%s259 + $0xf0] sm:$0xff]
        %v377 = vld [vmem:[%s259 + $0xf8] sm:$0xff]
        %378 = vmatprep.subr.mxu0 0.0
        %379 = vmatpush1.xpose.msra.mxu0 %v346
        %380 = vmatprep.subr.mxu0 0.0
        %381 = vmatpush1.xpose.msra.mxu0 %v347
        %382 = vmatprep.subr.mxu0 0.0
        %383 = vmatpush1.xpose.msra.mxu0 %v348
        %384 = vmatprep.subr.mxu0 0.0
        %385 = vmatpush1.xpose.msra.mxu0 %v349
        %386 = vmatprep.subr.mxu0 0.0
        %387 = vmatpush1.xpose.msra.mxu0 %v350
        %388 = vmatprep.subr.mxu0 0.0
        %389 = vmatpush1.xpose.msra.mxu0 %v351
        %390 = vmatprep.subr.mxu0 0.0
        %391 = vmatpush1.xpose.msra.mxu0 %v352
        %392 = vmatprep.subr.mxu0 0.0
        %393 = vmatpush1.xpose.msra.mxu0 %v353
        %394 = vmatprep.subr.mxu0 0.0
        %395 = vmatpush1.xpose.msra.mxu0 %v354
        %396 = vmatprep.subr.mxu0 0.0
        %397 = vmatpush1.xpose.msra.mxu0 %v355
        %398 = vmatprep.subr.mxu0 0.0
        %399 = vmatpush1.xpose.msra.mxu0 %v356
        %400 = vmatprep.subr.mxu0 0.0
        %401 = vmatpush1.xpose.msra.mxu0 %v357
        %402 = vmatprep.subr.mxu0 0.0
        %403 = vmatpush1.xpose.msra.mxu0 %v358
        %404 = vmatprep.subr.mxu0 0.0
        %405 = vmatpush1.xpose.msra.mxu0 %v359
        %406 = vmatprep.subr.mxu0 0.0
        %407 = vmatpush1.xpose.msra.mxu0 %v360
        %408 = vmatprep.subr.mxu0 0.0
        %409 = vmatpush1.xpose.msra.mxu0 %v361
        %410 = vmatprep.subr.mxu0 0.0
        %411 = vmatpush1.xpose.msra.mxu0 %v362
        %412 = vmatprep.subr.mxu0 0.0
        %413 = vmatpush1.xpose.msra.mxu0 %v363
        %414 = vmatprep.subr.mxu0 0.0
        %415 = vmatpush1.xpose.msra.mxu0 %v364
        %416 = vmatprep.subr.mxu0 0.0
        %417 = vmatpush1.xpose.msra.mxu0 %v365
        %418 = vmatprep.subr.mxu0 0.0
        %419 = vmatpush1.xpose.msra.mxu0 %v366
        %420 = vmatprep.subr.mxu0 0.0
        %421 = vmatpush1.xpose.msra.mxu0 %v367
        %422 = vmatprep.subr.mxu0 0.0
        %423 = vmatpush1.xpose.msra.mxu0 %v368
        %424 = vmatprep.subr.mxu0 0.0
        %425 = vmatpush1.xpose.msra.mxu0 %v369
        %426 = vmatprep.subr.mxu0 0.0
        %427 = vmatpush1.xpose.msra.mxu0 %v370
        %428 = vmatprep.subr.mxu0 0.0
        %429 = vmatpush1.xpose.msra.mxu0 %v371
        %430 = vmatprep.subr.mxu0 0.0
        %431 = vmatpush1.xpose.msra.mxu0 %v372
        %432 = vmatprep.subr.mxu0 0.0
        %433 = vmatpush1.xpose.msra.mxu0 %v373
        %434 = vmatprep.subr.mxu0 0.0
        %435 = vmatpush1.xpose.msra.mxu0 %v374
        %436 = vmatprep.subr.mxu0 0.0
        %437 = vmatpush1.xpose.msra.mxu0 %v375
        %438 = vmatprep.subr.mxu0 0.0
        %439 = vmatpush1.xpose.msra.mxu0 %v376
        %440 = vmatprep.subr.mxu0 0.0
        %441 = vmatpush1.xpose.msra.mxu0 %v377
        %442 = vmatprep.mubr.f32.mxu0 0.0
        %443 = vmatmul.mubr.f32.gmra.mrb[0].mxu0 %v312
        %v444 = vpop.f32.mrb[0].mxu0
        %v445 = vadd.f32 0.0, %v444
        %v446 = vpop.f32.mrb[0].mxu0
        %v447 = vadd.f32 0.0, %v446
        %448 = vmatprep.mubr.f32.mxu0 0.0
        %449 = vmatmul.mubr.f32.gmra.mrb[0].mxu0 %v313
        %v450 = vpop.f32.mrb[0].mxu0
        %v451 = vadd.f32 0.0, %v450
        %v452 = vpop.f32.mrb[0].mxu0
        %v453 = vadd.f32 0.0, %v452
        %454 = vmatprep.mubr.f32.mxu0 0.0
        %455 = vmatmul.mubr.f32.gmra.mrb[0].mxu0 %v314
        %v456 = vpop.f32.mrb[0].mxu0
        %v457 = vadd.f32 0.0, %v456
        %v458 = vpop.f32.mrb[0].mxu0
        %v459 = vadd.f32 0.0, %v458
        %460 = vmatprep.mubr.f32.mxu0 0.0
        %461 = vmatmul.mubr.f32.gmra.mrb[0].mxu0 %v315
        %v462 = vpop.f32.mrb[0].mxu0
        %v463 = vadd.f32 0.0, %v462
        %v464 = vpop.f32.mrb[0].mxu0
        %v465 = vadd.f32 0.0, %v464
        %466 = vmatprep.mubr.f32.mxu0 0.0
        %467 = vmatmul.mubr.f32.gmra.mrb[0].mxu0 %v316
        %v468 = vpop.f32.mrb[0].mxu0
        %v469 = vadd.f32 0.0, %v468
        %v470 = vpop.f32.mrb[0].mxu0
        %v471 = vadd.f32 0.0, %v470
        %472 = vmatprep.mubr.f32.mxu0 0.0
        %473 = vmatmul.mubr.f32.gmra.mrb[0].mxu0 %v317
        %v474 = vpop.f32.mrb[0].mxu0
        %v475 = vadd.f32 0.0, %v474
        %v476 = vpop.f32.mrb[0].mxu0
        %v477 = vadd.f32 0.0, %v476
        %478 = vmatprep.mubr.f32.mxu0 0.0
        %479 = vmatmul.mubr.f32.gmra.mrb[0].mxu0 %v318
        %v480 = vpop.f32.mrb[0].mxu0
        %v481 = vadd.f32 0.0, %v480
        %v482 = vpop.f32.mrb[0].mxu0
        %v483 = vadd.f32 0.0, %v482
        %484 = vmatprep.mubr.f32.mxu0 0.0
        %485 = vmatmul.mubr.f32.gmra.mrb[0].mxu0 %v319
        %v486 = vpop.f32.mrb[0].mxu0
        %v487 = vadd.f32 0.0, %v486
        %v488 = vpop.f32.mrb[0].mxu0
        %v489 = vadd.f32 0.0, %v488
        %490 = vmatprep.mubr.f32.mxu0 0.0
        %491 = vmatmul.mubr.f32.gmra.mrb[0].mxu0 %v320
        %v492 = vpop.f32.mrb[0].mxu0
        %v493 = vadd.f32 0.0, %v492
        %v494 = vpop.f32.mrb[0].mxu0
        %v495 = vadd.f32 0.0, %v494
        %496 = vmatprep.mubr.f32.mxu0 0.0
        %497 = vmatmul.mubr.f32.gmra.mrb[0].mxu0 %v321
        %v498 = vpop.f32.mrb[0].mxu0
        %v499 = vadd.f32 0.0, %v498
        %v500 = vpop.f32.mrb[0].mxu0
        %v501 = vadd.f32 0.0, %v500
        %502 = vmatprep.mubr.f32.mxu0 0.0
        %503 = vmatmul.mubr.f32.gmra.mrb[0].mxu0 %v322
        %v504 = vpop.f32.mrb[0].mxu0
        %v505 = vadd.f32 0.0, %v504
        %v506 = vpop.f32.mrb[0].mxu0
        %v507 = vadd.f32 0.0, %v506
        %508 = vmatprep.mubr.f32.mxu0 0.0
        %509 = vmatmul.mubr.f32.gmra.mrb[0].mxu0 %v323
        %v510 = vpop.f32.mrb[0].mxu0
        %v511 = vadd.f32 0.0, %v510
        %v512 = vpop.f32.mrb[0].mxu0
        %v513 = vadd.f32 0.0, %v512
        %514 = vmatprep.mubr.f32.mxu0 0.0
        %515 = vmatmul.mubr.f32.gmra.mrb[0].mxu0 %v324
        %v516 = vpop.f32.mrb[0].mxu0
        %v517 = vadd.f32 0.0, %v516
        %v518 = vpop.f32.mrb[0].mxu0
        %v519 = vadd.f32 0.0, %v518
        %520 = vmatprep.mubr.f32.mxu0 0.0
        %521 = vmatmul.mubr.f32.gmra.mrb[0].mxu0 %v325
        %v522 = vpop.f32.mrb[0].mxu0
        %v523 = vadd.f32 0.0, %v522
        %v524 = vpop.f32.mrb[0].mxu0
        %v525 = vadd.f32 0.0, %v524
        %526 = vmatprep.mubr.f32.mxu0 0.0
        %527 = vmatmul.mubr.f32.gmra.mrb[0].mxu0 %v326
        %v528 = vpop.f32.mrb[0].mxu0
        %v529 = vadd.f32 0.0, %v528
        %v530 = vpop.f32.mrb[0].mxu0
        %v531 = vadd.f32 0.0, %v530
        %532 = vmatprep.mubr.f32.mxu0 0.0
        %533 = vmatmul.mubr.f32.gmra.mrb[0].mxu0 %v327
        %v534 = vpop.f32.mrb[0].mxu0
        %v535 = vadd.f32 0.0, %v534
        %v536 = vpop.f32.mrb[0].mxu0
        %v537 = vadd.f32 0.0, %v536
        %538 = vmatprep.mubr.f32.mxu0 0.0
        %539 = vmatmul.mubr.f32.gmra.mrb[0].mxu0 %v328
        %v540 = vpop.f32.mrb[0].mxu0
        %v541 = vadd.f32 0.0, %v540
        %v542 = vpop.f32.mrb[0].mxu0
        %v543 = vadd.f32 0.0, %v542
        %544 = vmatprep.mubr.f32.mxu0 0.0
        %545 = vmatmul.mubr.f32.gmra.mrb[0].mxu0 %v329
        %v546 = vpop.f32.mrb[0].mxu0
        %v547 = vadd.f32 0.0, %v546
        %v548 = vpop.f32.mrb[0].mxu0
        %v549 = vadd.f32 0.0, %v548
        %550 = vmatprep.mubr.f32.mxu0 0.0
        %551 = vmatmul.mubr.f32.gmra.mrb[0].mxu0 %v330
        %v552 = vpop.f32.mrb[0].mxu0
        %v553 = vadd.f32 0.0, %v552
        %v554 = vpop.f32.mrb[0].mxu0
        %v555 = vadd.f32 0.0, %v554
        %556 = vmatprep.mubr.f32.mxu0 0.0
        %557 = vmatmul.mubr.f32.gmra.mrb[0].mxu0 %v331
        %v558 = vpop.f32.mrb[0].mxu0
        %v559 = vadd.f32 0.0, %v558
        %v560 = vpop.f32.mrb[0].mxu0
        %v561 = vadd.f32 0.0, %v560
        %562 = vmatprep.mubr.f32.mxu0 0.0
        %563 = vmatmul.mubr.f32.gmra.mrb[0].mxu0 %v332
        %v564 = vpop.f32.mrb[0].mxu0
        %v565 = vadd.f32 0.0, %v564
        %v566 = vpop.f32.mrb[0].mxu0
        %v567 = vadd.f32 0.0, %v566
        %568 = vmatprep.mubr.f32.mxu0 0.0
        %569 = vmatmul.mubr.f32.gmra.mrb[0].mxu0 %v333
        %v570 = vpop.f32.mrb[0].mxu0
        %v571 = vadd.f32 0.0, %v570
        %v572 = vpop.f32.mrb[0].mxu0
        %v573 = vadd.f32 0.0, %v572
        %574 = vmatprep.mubr.f32.mxu0 0.0
        %575 = vmatmul.mubr.f32.gmra.mrb[0].mxu0 %v334
        %v576 = vpop.f32.mrb[0].mxu0
        %v577 = vadd.f32 0.0, %v576
        %v578 = vpop.f32.mrb[0].mxu0
        %v579 = vadd.f32 0.0, %v578
        %580 = vmatprep.mubr.f32.mxu0 0.0
        %581 = vmatmul.mubr.f32.gmra.mrb[0].mxu0 %v335
        %v582 = vpop.f32.mrb[0].mxu0
        %v583 = vadd.f32 0.0, %v582
        %v584 = vpop.f32.mrb[0].mxu0
        %v585 = vadd.f32 0.0, %v584
        %586 = vmatprep.mubr.f32.mxu0 0.0
        %587 = vmatmul.mubr.f32.gmra.mrb[0].mxu0 %v336
        %v588 = vpop.f32.mrb[0].mxu0
        %v589 = vadd.f32 0.0, %v588
        %v590 = vpop.f32.mrb[0].mxu0
        %v591 = vadd.f32 0.0, %v590
        %592 = vmatprep.mubr.f32.mxu0 0.0
        %593 = vmatmul.mubr.f32.gmra.mrb[0].mxu0 %v337
        %v594 = vpop.f32.mrb[0].mxu0
        %v595 = vadd.f32 0.0, %v594
        %v596 = vpop.f32.mrb[0].mxu0
        %v597 = vadd.f32 0.0, %v596
        %598 = vmatprep.mubr.f32.mxu0 0.0
        %599 = vmatmul.mubr.f32.gmra.mrb[0].mxu0 %v338
        %v600 = vpop.f32.mrb[0].mxu0
        %v601 = vadd.f32 0.0, %v600
        %v602 = vpop.f32.mrb[0].mxu0
        %v603 = vadd.f32 0.0, %v602
        %604 = vmatprep.mubr.f32.mxu0 0.0
        %605 = vmatmul.mubr.f32.gmra.mrb[0].mxu0 %v339
        %v606 = vpop.f32.mrb[0].mxu0
        %v607 = vadd.f32 0.0, %v606
        %v608 = vpop.f32.mrb[0].mxu0
        %v609 = vadd.f32 0.0, %v608
        %610 = vmatprep.mubr.f32.mxu0 0.0
        %611 = vmatmul.mubr.f32.gmra.mrb[0].mxu0 %v340
        %v612 = vpop.f32.mrb[0].mxu0
        %v613 = vadd.f32 0.0, %v612
        %v614 = vpop.f32.mrb[0].mxu0
        %v615 = vadd.f32 0.0, %v614
        %616 = vmatprep.mubr.f32.mxu0 0.0
        %617 = vmatmul.mubr.f32.gmra.mrb[0].mxu0 %v341
        %v618 = vpop.f32.mrb[0].mxu0
        %v619 = vadd.f32 0.0, %v618
        %v620 = vpop.f32.mrb[0].mxu0
        %v621 = vadd.f32 0.0, %v620
        %622 = vmatprep.mubr.f32.mxu0 0.0
        %623 = vmatmul.mubr.f32.gmra.mrb[0].mxu0 %v342
        %v624 = vpop.f32.mrb[0].mxu0
        %v625 = vadd.f32 0.0, %v624
        %v626 = vpop.f32.mrb[0].mxu0
        %v627 = vadd.f32 0.0, %v626
        %628 = vmatprep.mubr.f32.mxu0 0.0
        %629 = vmatmul.mubr.f32.gmra.mrb[0].mxu0 %v343
        %v630 = vpop.f32.mrb[0].mxu0
        %v631 = vadd.f32 0.0, %v630
        %v632 = vpop.f32.mrb[0].mxu0
        %v633 = vadd.f32 0.0, %v632
        %634 = vmatprep.mubr.f32.mxu0 0.0
        %635 = vmatmul.mubr.f32.gmra.mrb[0].mxu0 %v344
        %v636 = vpop.f32.mrb[0].mxu0
        %v637 = vadd.f32 0.0, %v636
        %v638 = vpop.f32.mrb[0].mxu0
        %v639 = vadd.f32 0.0, %v638
        %640 = vmatprep.mubr.f32.mxu0 0.0
        %641 = vmatmul.mubr.f32.gmra.mrb[0].mxu0 %v345
        %v642 = vpop.f32.mrb[0].mxu0
        %v643 = vadd.f32 0.0, %v642
        %v644 = vpop.f32.mrb[0].mxu0
        %v645 = vadd.f32 0.0, %v644
        %646 = vdwg.mxu0
        %v647 = vlaneseq
        %v648 = vshrl.u32 %v647, 7
        %v649 = vadd.s32 %v648, 8
        %vm650 = vcmp.lt.s32.totalorder %v648, 10
        %vm651 = vcmp.lt.s32.totalorder %v649, 10
        %v652 = vsel %vm650, %v445, -1e+30
        %v653 = vsel %vm650, %v447, -1e+30
        %v654 = vsel %vm651, %v451, -1e+30
        %v655 = vsel %vm651, %v453, -1e+30
        %v656 = vmax.f32 %v652, %v654
        %v657 = vrot.slane %v656, 4
        %v658 = vmax.f32 %v656, %v657
        %v659 = vrot.slane %v658, 2
        %v660 = vmax.f32 %v658, %v659
        %v661 = vrot.slane %v660, 1
        %v662 = vmax.f32 %v660, %v661
        %v663 = vmax.f32 %v653, %v655
        %v664 = vrot.slane %v663, 4
        %v665 = vmax.f32 %v663, %v664
        %v666 = vrot.slane %v665, 2
        %v667 = vmax.f32 %v665, %v666
        %v668 = vrot.slane %v667, 1
        %v669 = vmax.f32 %v667, %v668
        %v670 = vsub.f32 %v652, %v662
        %v671 = vsub.f32 %v653, %v669
        %v672 = vsub.f32 %v654, %v662
        %v673 = vsub.f32 %v655, %v669
        %v674 = vmul.f32 %v670, 1.442695
        %v675 = vpow.pop %v674
        %v676 = vmul.f32 %v671, 1.442695
        %v677 = vpow.pop %v676
        %v678 = vmul.f32 %v672, 1.442695
        %v679 = vpow.pop %v678
        %v680 = vmul.f32 %v673, 1.442695
        %v681 = vpow.pop %v680
        %v682 = vadd.f32 %v675, %v679
        %v683 = vrot.slane %v682, 4
        %v684 = vadd.f32 %v682, %v683
        %v685 = vrot.slane %v684, 2
        %v686 = vadd.f32 %v684, %v685
        %v687 = vrot.slane %v686, 1
        %v688 = vadd.f32 %v686, %v687
        %v689 = vadd.f32 %v677, %v681
        %v690 = vrot.slane %v689, 4
        %v691 = vadd.f32 %v689, %v690
        %v692 = vrot.slane %v691, 2
        %v693 = vadd.f32 %v691, %v692
        %v694 = vrot.slane %v693, 1
        %v695 = vadd.f32 %v693, %v694
        %v696 = vlog2.pop %v688
        %v697 = vmul.f32 %v696, 0.6931472
        %v698 = vlog2.pop %v695
        %v699 = vmul.f32 %v698, 0.6931472
        %v700 = vadd.f32 %v662, %v697
        %v701 = vadd.f32 %v669, %v699
        %vm702 = vcmp.ge.s32.totalorder %v311, 8
        %vm703 = vcmp.lt.s32.totalorder %v311, 14
        %vm704 = vmand %vm702, %vm703
        %v705 = vsel %vm704, 8, %v311
        %vm706 = vcmp.ge.s32.totalorder %v311, 14
        %vm707 = vcmp.lt.s32.totalorder %v311, 20
        %vm708 = vmand %vm706, %vm707
        %v709 = vsel %vm708, 9, %v705
        %v710 = vlaneseq
        %v711 = vshrl.u32 %v710, 7
        %v712 = vsub.s32 0, %v711
        %v713 = vrot.slane %v709, %v712
        %v714 = vlaneseq
        %v715 = vshrl.u32 %v714, 7
        %v716 = vsub.s32 1, %v715
        %v717 = vrot.slane %v709, %v716
        %vm718 = vcmp.eq.s32.totalorder %v648, %v713
        %vm719 = vcmp.eq.s32.totalorder %v648, %v717
        %vm720 = vcmp.eq.s32.totalorder %v649, %v713
        %vm721 = vcmp.eq.s32.totalorder %v649, %v717
        %v722 = vsel %vm718, %v652, 0.0
        %v723 = vsel %vm719, %v653, 0.0
        %v724 = vsel %vm720, %v654, 0.0
        %v725 = vsel %vm721, %v655, 0.0
        %v726 = vadd.f32 %v722, %v724
        %v727 = vrot.slane %v726, 4
        %v728 = vadd.f32 %v726, %v727
        %v729 = vrot.slane %v728, 2
        %v730 = vadd.f32 %v728, %v729
        %v731 = vrot.slane %v730, 1
        %v732 = vadd.f32 %v730, %v731
        %v733 = vadd.f32 %v723, %v725
        %v734 = vrot.slane %v733, 4
        %v735 = vadd.f32 %v733, %v734
        %v736 = vrot.slane %v735, 2
        %v737 = vadd.f32 %v735, %v736
        %v738 = vrot.slane %v737, 1
        %v739 = vadd.f32 %v737, %v738
        %v740 = vsub.f32 %v732, %v700
        %v741 = vsub.f32 %v739, %v701
        %v742 = vld [vmem:[%s3] sm:$0xff]
        %743 = vmatprep.subr.mxu0 %v459
        %744 = vmatpush1.msra.mxu0 %v457
        %745 = vmatprep.subr.mxu0 %v465
        %746 = vmatpush1.msra.mxu0 %v463
        %747 = vmatprep.subr.mxu0 %v471
        %748 = vmatpush1.msra.mxu0 %v469
        %749 = vmatprep.subr.mxu0 %v477
        %750 = vmatpush1.msra.mxu0 %v475
        %751 = vmatprep.subr.mxu0 %v483
        %752 = vmatpush1.msra.mxu0 %v481
        %753 = vmatprep.subr.mxu0 %v489
        %754 = vmatpush1.msra.mxu0 %v487
        %755 = vmatprep.subr.mxu0 %v495
        %756 = vmatpush1.msra.mxu0 %v493
        %757 = vmatprep.subr.mxu0 %v501
        %758 = vmatpush1.msra.mxu0 %v499
        %759 = vmatprep.subr.mxu0 %v507
        %760 = vmatpush1.msra.mxu0 %v505
        %761 = vmatprep.subr.mxu0 %v513
        %762 = vmatpush1.msra.mxu0 %v511
        %763 = vmatprep.subr.mxu0 %v519
        %764 = vmatpush1.msra.mxu0 %v517
        %765 = vmatprep.subr.mxu0 %v525
        %766 = vmatpush1.msra.mxu0 %v523
        %767 = vmatprep.subr.mxu0 %v531
        %768 = vmatpush1.msra.mxu0 %v529
        %769 = vmatprep.subr.mxu0 %v537
        %770 = vmatpush1.msra.mxu0 %v535
        %771 = vmatprep.subr.mxu0 %v543
        %772 = vmatpush1.msra.mxu0 %v541
        %773 = vmatprep.subr.mxu0 %v549
        %774 = vmatpush1.msra.mxu0 %v547
        %775 = vmatprep.subr.mxu0 0.0
        %776 = vmatpush1.msra.mxu0 0.0
        %777 = vmatprep.subr.mxu0 0.0
        %778 = vmatpush1.msra.mxu0 0.0
        %779 = vmatprep.subr.mxu0 0.0
        %780 = vmatpush1.msra.mxu0 0.0
        %781 = vmatprep.subr.mxu0 0.0
        %782 = vmatpush1.msra.mxu0 0.0
        %783 = vmatprep.subr.mxu0 0.0
        %784 = vmatpush1.msra.mxu0 0.0
        %785 = vmatprep.subr.mxu0 0.0
        %786 = vmatpush1.msra.mxu0 0.0
        %787 = vmatprep.subr.mxu0 0.0
        %788 = vmatpush1.msra.mxu0 0.0
        %789 = vmatprep.subr.mxu0 0.0
        %790 = vmatpush1.msra.mxu0 0.0
        %791 = vmatprep.subr.mxu0 0.0
        %792 = vmatpush1.msra.mxu0 0.0
        %793 = vmatprep.subr.mxu0 0.0
        %794 = vmatpush1.msra.mxu0 0.0
        %795 = vmatprep.subr.mxu0 0.0
        %796 = vmatpush1.msra.mxu0 0.0
        %797 = vmatprep.subr.mxu0 0.0
        %798 = vmatpush1.msra.mxu0 0.0
        %799 = vmatprep.subr.mxu0 0.0
        %800 = vmatpush1.msra.mxu0 0.0
        %801 = vmatprep.subr.mxu0 0.0
        %802 = vmatpush1.msra.mxu0 0.0
        %803 = vmatprep.subr.mxu0 0.0
        %804 = vmatpush1.msra.mxu0 0.0
        %805 = vmatprep.subr.mxu0 0.0
        %806 = vmatpush1.msra.mxu0 0.0
        %807 = vmatprep.mubr.f32.mxu0 0.0
        %808 = vmatmul.mubr.f32.gmra.mrb[0].mxu0 %v742
        %v809 = vpop.f32.mrb[0].mxu0
        %v810 = vadd.f32 0.0, %v809
        %v811 = vpop.f32.mrb[0].mxu0
        %v812 = vadd.f32 0.0, %v811
        %813 = vdwg.mxu0
        %vm814 = vcmp.lt.s32.totalorder %v648, 6
        %v815 = vsel %vm814, %v810, -1e+30
        %v816 = vsel %vm814, %v812, -1e+30
        %v817 = vrot.slane %v815, 4
        %v818 = vmax.f32 %v815, %v817
        %v819 = vrot.slane %v818, 2
        %v820 = vmax.f32 %v818, %v819
        %v821 = vrot.slane %v820, 1
        %v822 = vmax.f32 %v820, %v821
        %v823 = vrot.slane %v816, 4
        %v824 = vmax.f32 %v816, %v823
        %v825 = vrot.slane %v824, 2
        %v826 = vmax.f32 %v824, %v825
        %v827 = vrot.slane %v826, 1
        %v828 = vmax.f32 %v826, %v827
        %v829 = vsub.f32 %v815, %v822
        %v830 = vsub.f32 %v816, %v828
        %v831 = vmul.f32 %v829, 1.442695
        %v832 = vpow.pop %v831
        %v833 = vmul.f32 %v830, 1.442695
        %v834 = vpow.pop %v833
        %v835 = vrot.slane %v832, 4
        %v836 = vadd.f32 %v832, %v835
        %v837 = vrot.slane %v836, 2
        %v838 = vadd.f32 %v836, %v837
        %v839 = vrot.slane %v838, 1
        %v840 = vadd.f32 %v838, %v839
        %v841 = vrot.slane %v834, 4
        %v842 = vadd.f32 %v834, %v841
        %v843 = vrot.slane %v842, 2
        %v844 = vadd.f32 %v842, %v843
        %v845 = vrot.slane %v844, 1
        %v846 = vadd.f32 %v844, %v845
        %v847 = vlog2.pop %v840
        %v848 = vmul.f32 %v847, 0.6931472
        %v849 = vlog2.pop %v846
        %v850 = vmul.f32 %v849, 0.6931472
        %v851 = vadd.f32 %v822, %v848
        %v852 = vadd.f32 %v828, %v850
        %v853 = vsub.s32 %v311, 8
        %vm854 = vcmp.gt.s32.totalorder %v853, 0
        %v855 = vsel %vm854, %v853, 0
        %vm856 = vcmp.lt.s32.totalorder %v855, 5
        %v857 = vsel %vm856, %v855, 5
        %v858 = vlaneseq
        %v859 = vshrl.u32 %v858, 7
        %v860 = vsub.s32 0, %v859
        %v861 = vrot.slane %v857, %v860
        %v862 = vlaneseq
        %v863 = vshrl.u32 %v862, 7
        %v864 = vsub.s32 1, %v863
        %v865 = vrot.slane %v857, %v864
        %vm866 = vcmp.eq.s32.totalorder %v648, %v861
        %vm867 = vcmp.eq.s32.totalorder %v648, %v865
        %v868 = vsel %vm866, %v815, 0.0
        %v869 = vsel %vm867, %v816, 0.0
        %v870 = vrot.slane %v868, 4
        %v871 = vadd.f32 %v868, %v870
        %v872 = vrot.slane %v871, 2
        %v873 = vadd.f32 %v871, %v872
        %v874 = vrot.slane %v873, 1
        %v875 = vadd.f32 %v873, %v874
        %v876 = vrot.slane %v869, 4
        %v877 = vadd.f32 %v869, %v876
        %v878 = vrot.slane %v877, 2
        %v879 = vadd.f32 %v877, %v878
        %v880 = vrot.slane %v879, 1
        %v881 = vadd.f32 %v879, %v880
        %v882 = vsub.f32 %v875, %v851
        %v883 = vsub.f32 %v881, %v852
        %v886 = vcombine.low %v882, %v883
        %v888 = vunpack.c.l.s4 1966171168
        %v889 = vunpack.c.0.s8 %v888
        %v890 = vlaneseq
        %v891 = vshrl.u32 %v890, 7
        %v892 = vsub.s32 %v889, %v891
        %v893 = vrot.slane %v886, %v892
        %v895 = vunpack.c.l.s4 1966171168
        %v896 = vunpack.c.0.s8 %v895
        %v897 = vlaneseq
        %v898 = vshrl.u32 %v897, 7
        %v899 = vsub.s32 %v896, %v898
        %v900 = vrot.slane %v893, %v899
        %v902 = vsel %vm704, %v900, 0.0
        %v904 = vlaneseq
        %v905 = vshrl.u32 %v904, 7
        %v906 = vsub.s32 0, %v905
        %v907 = vrot.slane %v902, %v906
        %v908 = vlaneseq
        %v909 = vshrl.u32 %v908, 7
        %v910 = vsub.s32 1, %v909
        %v911 = vrot.slane %v902, %v910
        %v914 = vadd.f32 %v740, %v907
        %v915 = vadd.f32 %v741, %v911
        %v916 = vld [vmem:[#allocation8] sm:$0xff]
        %917 = vmatprep.subr.mxu0 %v555
        %918 = vmatpush1.msra.mxu0 %v553
        %919 = vmatprep.subr.mxu0 %v561
        %920 = vmatpush1.msra.mxu0 %v559
        %921 = vmatprep.subr.mxu0 %v567
        %922 = vmatpush1.msra.mxu0 %v565
        %923 = vmatprep.subr.mxu0 %v573
        %924 = vmatpush1.msra.mxu0 %v571
        %925 = vmatprep.subr.mxu0 %v579
        %926 = vmatpush1.msra.mxu0 %v577
        %927 = vmatprep.subr.mxu0 %v585
        %928 = vmatpush1.msra.mxu0 %v583
        %929 = vmatprep.subr.mxu0 %v591
        %930 = vmatpush1.msra.mxu0 %v589
        %931 = vmatprep.subr.mxu0 %v597
        %932 = vmatpush1.msra.mxu0 %v595
        %933 = vmatprep.subr.mxu0 %v603
        %934 = vmatpush1.msra.mxu0 %v601
        %935 = vmatprep.subr.mxu0 %v609
        %936 = vmatpush1.msra.mxu0 %v607
        %937 = vmatprep.subr.mxu0 %v615
        %938 = vmatpush1.msra.mxu0 %v613
        %939 = vmatprep.subr.mxu0 %v621
        %940 = vmatpush1.msra.mxu0 %v619
        %941 = vmatprep.subr.mxu0 %v627
        %942 = vmatpush1.msra.mxu0 %v625
        %943 = vmatprep.subr.mxu0 %v633
        %944 = vmatpush1.msra.mxu0 %v631
        %945 = vmatprep.subr.mxu0 %v639
        %946 = vmatpush1.msra.mxu0 %v637
        %947 = vmatprep.subr.mxu0 %v645
        %948 = vmatpush1.msra.mxu0 %v643
        %949 = vmatprep.subr.mxu0 0.0
        %950 = vmatpush1.msra.mxu0 0.0
        %951 = vmatprep.subr.mxu0 0.0
        %952 = vmatpush1.msra.mxu0 0.0
        %953 = vmatprep.subr.mxu0 0.0
        %954 = vmatpush1.msra.mxu0 0.0
        %955 = vmatprep.subr.mxu0 0.0
        %956 = vmatpush1.msra.mxu0 0.0
        %957 = vmatprep.subr.mxu0 0.0
        %958 = vmatpush1.msra.mxu0 0.0
        %959 = vmatprep.subr.mxu0 0.0
        %960 = vmatpush1.msra.mxu0 0.0
        %961 = vmatprep.subr.mxu0 0.0
        %962 = vmatpush1.msra.mxu0 0.0
        %963 = vmatprep.subr.mxu0 0.0
        %964 = vmatpush1.msra.mxu0 0.0
        %965 = vmatprep.subr.mxu0 0.0
        %966 = vmatpush1.msra.mxu0 0.0
        %967 = vmatprep.subr.mxu0 0.0
        %968 = vmatpush1.msra.mxu0 0.0
        %969 = vmatprep.subr.mxu0 0.0
        %970 = vmatpush1.msra.mxu0 0.0
        %971 = vmatprep.subr.mxu0 0.0
        %972 = vmatpush1.msra.mxu0 0.0
        %973 = vmatprep.subr.mxu0 0.0
        %974 = vmatpush1.msra.mxu0 0.0
        %975 = vmatprep.subr.mxu0 0.0
        %976 = vmatpush1.msra.mxu0 0.0
        %977 = vmatprep.subr.mxu0 0.0
        %978 = vmatpush1.msra.mxu0 0.0
        %979 = vmatprep.subr.mxu0 0.0
        %980 = vmatpush1.msra.mxu0 0.0
        %981 = vmatprep.mubr.f32.mxu0 0.0
        %982 = vmatmul.mubr.f32.gmra.mrb[0].mxu0 %v916
        %v983 = vpop.f32.mrb[0].mxu0
        %v984 = vadd.f32 0.0, %v983
        %v985 = vpop.f32.mrb[0].mxu0
        %v986 = vadd.f32 0.0, %v985
        %987 = vdwg.mxu0
        %v988 = vsel %vm814, %v984, -1e+30
        %v989 = vsel %vm814, %v986, -1e+30
        %v990 = vrot.slane %v988, 4
        %v991 = vmax.f32 %v988, %v990
        %v992 = vrot.slane %v991, 2
        %v993 = vmax.f32 %v991, %v992
        %v994 = vrot.slane %v993, 1
        %v995 = vmax.f32 %v993, %v994
        %v996 = vrot.slane %v989, 4
        %v997 = vmax.f32 %v989, %v996
        %v998 = vrot.slane %v997, 2
        %v999 = vmax.f32 %v997, %v998
        %v1000 = vrot.slane %v999, 1
        %v1001 = vmax.f32 %v999, %v1000
        %v1002 = vsub.f32 %v988, %v995
        %v1003 = vsub.f32 %v989, %v1001
        %v1004 = vmul.f32 %v1002, 1.442695
        %v1005 = vpow.pop %v1004
        %v1006 = vmul.f32 %v1003, 1.442695
        %v1007 = vpow.pop %v1006
        %v1008 = vrot.slane %v1005, 4
        %v1009 = vadd.f32 %v1005, %v1008
        %v1010 = vrot.slane %v1009, 2
        %v1011 = vadd.f32 %v1009, %v1010
        %v1012 = vrot.slane %v1011, 1
        %v1013 = vadd.f32 %v1011, %v1012
        %v1014 = vrot.slane %v1007, 4
        %v1015 = vadd.f32 %v1007, %v1014
        %v1016 = vrot.slane %v1015, 2
        %v1017 = vadd.f32 %v1015, %v1016
        %v1018 = vrot.slane %v1017, 1
        %v1019 = vadd.f32 %v1017, %v1018
        %v1020 = vlog2.pop %v1013
        %v1021 = vmul.f32 %v1020, 0.6931472
        %v1022 = vlog2.pop %v1019
        %v1023 = vmul.f32 %v1022, 0.6931472
        %v1024 = vadd.f32 %v995, %v1021
        %v1025 = vadd.f32 %v1001, %v1023
        %v1026 = vsub.s32 %v311, 14
        %vm1027 = vcmp.gt.s32.totalorder %v1026, 0
        %v1028 = vsel %vm1027, %v1026, 0
        %vm1029 = vcmp.lt.s32.totalorder %v1028, 5
        %v1030 = vsel %vm1029, %v1028, 5
        %v1031 = vlaneseq
        %v1032 = vshrl.u32 %v1031, 7
        %v1033 = vsub.s32 0, %v1032
        %v1034 = vrot.slane %v1030, %v1033
        %v1035 = vlaneseq
        %v1036 = vshrl.u32 %v1035, 7
        %v1037 = vsub.s32 1, %v1036
        %v1038 = vrot.slane %v1030, %v1037
        %vm1039 = vcmp.eq.s32.totalorder %v648, %v1034
        %vm1040 = vcmp.eq.s32.totalorder %v648, %v1038
        %v1041 = vsel %vm1039, %v988, 0.0
        %v1042 = vsel %vm1040, %v989, 0.0
        %v1043 = vrot.slane %v1041, 4
        %v1044 = vadd.f32 %v1041, %v1043
        %v1045 = vrot.slane %v1044, 2
        %v1046 = vadd.f32 %v1044, %v1045
        %v1047 = vrot.slane %v1046, 1
        %v1048 = vadd.f32 %v1046, %v1047
        %v1049 = vrot.slane %v1042, 4
        %v1050 = vadd.f32 %v1042, %v1049
        %v1051 = vrot.slane %v1050, 2
        %v1052 = vadd.f32 %v1050, %v1051
        %v1053 = vrot.slane %v1052, 1
        %v1054 = vadd.f32 %v1052, %v1053
        %v1055 = vsub.f32 %v1048, %v1024
        %v1056 = vsub.f32 %v1054, %v1025
        %v1059 = vcombine.low %v1055, %v1056
        %v1061 = vunpack.c.l.s4 1966171168
        %v1062 = vunpack.c.0.s8 %v1061
        %v1063 = vlaneseq
        %v1064 = vshrl.u32 %v1063, 7
        %v1065 = vsub.s32 %v1062, %v1064
        %v1066 = vrot.slane %v1059, %v1065
        %v1068 = vunpack.c.l.s4 1966171168
        %v1069 = vunpack.c.0.s8 %v1068
        %v1070 = vlaneseq
        %v1071 = vshrl.u32 %v1070, 7
        %v1072 = vsub.s32 %v1069, %v1071
        %v1073 = vrot.slane %v1066, %v1072
        %v1075 = vsel %vm708, %v1073, 0.0
        %v1077 = vlaneseq
        %v1078 = vshrl.u32 %v1077, 7
        %v1079 = vsub.s32 0, %v1078
        %v1080 = vrot.slane %v1075, %v1079
        %v1081 = vlaneseq
        %v1082 = vshrl.u32 %v1081, 7
        %v1083 = vsub.s32 1, %v1082
        %v1084 = vrot.slane %v1075, %v1083
        %v1087 = vadd.f32 %v914, %v1080
        %v1088 = vadd.f32 %v915, %v1084
        %v1091 = vcombine.low %v1087, %v1088
        %v1093 = vunpack.c.l.s4 1966171168
        %v1094 = vunpack.c.0.s8 %v1093
        %v1095 = vlaneseq
        %v1096 = vshrl.u32 %v1095, 7
        %v1097 = vsub.s32 %v1094, %v1096
        %v1098 = vrot.slane %v1091, %v1097
        %v1100 = vunpack.c.l.s4 1966171168
        %v1101 = vunpack.c.0.s8 %v1100
        %v1102 = vlaneseq
        %v1103 = vshrl.u32 %v1102, 7
        %v1104 = vsub.s32 %v1101, %v1103
        %v1105 = vrot.slane %v1098, %v1104
        %v1107 = vlaneseq
        %vm1108 = vcmp.ge.s32.totalorder %v1107, 0
        %vm1109 = vcmp.lt.s32.totalorder %v1107, 256
        %vm1110 = vmand %vm1108, %vm1109
        %1111 = vst.msk [vmem:[%s307] sm:$0x3] %vm1110, %v1105
        %s1112 = sand.u32 %s149, 1
        %s1113 = scalar_lea.sflag [#allocation4], %s1112
        %s1114 = sand.u32 %s149, 1
        %s1115 = smul.addr %s1114, 2
        %s1116 = scalar_lea.vmem [#allocation10], %s1115
        // Predicated region
        $region57: #{tpu_custom_call.1} parent=39 // pred_check
          %p1117 = pneg %p159
        $region58: #{tpu_custom_call.1} parent=39 // pred_check_branch
          %1119 = sbr.rel (%p1117) target = $region60
        $region59: #{tpu_custom_call.1} parent=39 // pred_region
          %s1120 = smul.u32 2, %s26
          %s1122 = ssub.s32 32, 32
          %1123 = vsyncadd %s1113, %s1122
          %s1124 = smul.addr %s1120, 16
          %s1125 = scalar_lea.hbm %s5, %s1124
          %s1127 = sshll.u32 %s1116, 4
          %s1128 = int_to_ptr.vmem [resolvable:$true] %s1127
          %1130 = dma.vmem_to_hbm [thread:$0]  %s1128, 32, %s1125, %s1113
        $region60: #{tpu_custom_call.1} parent=39 // pred_fallthru
          _
      $region40: #{tpu_custom_call.1} parent=5 // pred_fallthru
        _
      %p1131 = scmp.le.s32.totalorder 2, %s21
      // Predicated region
      $region61: #{tpu_custom_call.1} parent=5 // pred_check
        %p1132 = pneg %p1131
      $region62: #{tpu_custom_call.1} parent=5 // pred_check_branch
        %1134 = sbr.rel (%p1132) target = $region64
      $region63: #{tpu_custom_call.1} parent=5 // pred_region
        %s1135 = ssub.s32 %s21, 2
        // Predicated region
        $region65: #{tpu_custom_call.1} parent=63 // pred_check
          %p1136 = pneg %p165
        $region66: #{tpu_custom_call.1} parent=63 // pred_check_branch
          %1138 = sbr.rel (%p1136) target = $region68
        $region67: #{tpu_custom_call.1} parent=63 // pred_region
          %s1139 = sand.u32 %s150, 1
          %s1140 = scalar_lea.sflag [#allocation4], %s1139
          %s1141 = sand.u32 %s150, 1
          %s1142 = smul.addr %s1141, 2
          %s1143 = scalar_lea.vmem [#allocation10], %s1142
          %1144 = dma.done %s1140, 32
        $region68: #{tpu_custom_call.1} parent=63 // pred_fallthru
          _
      $region64: #{tpu_custom_call.1} parent=5 // pred_fallthru
        _
    $region6: #{tpu_custom_call.1} parent=1 // loop_footer
      %s25 = sadd.s32 1, %s21
    $region7: #{tpu_custom_call.1} parent=1 // loop_footer_branch
      %20 = sbr.rel target = $region3
    $region8: #{tpu_custom_call.1} parent=1 // loop_exit
      _
    %1145 = vsyncpa [#allocation3], 1
    %s1146 = scalar_lea.sflag [#allocation3], 1
    %1147 = vsyncpa %s1146, 1
    %1148 = vsyncpa [#allocation6], 1
    %s1149 = scalar_lea.sflag [#allocation6], 1
    %1150 = vsyncpa %s1149, 1
    %1151 = vsyncpa [#allocation9], 1
    %1152 = vsyncpa [#allocation4], 1
    %s1153 = scalar_lea.sflag [#allocation4], 1
    %1154 = vsyncpa %s1153, 1

</llo_original>
